<compile_context>
chip_gen: v6e
topology: v6e:2x2x1
jax: 0.10.0
libtpu: 0.0.40
codegen_flags: <defaults>
</compile_context>

<pallas_src>
import functools

import jax
import jax.numpy as jnp
from jax import lax
from jax.experimental import pallas as pl
from jax.experimental.pallas import tpu as pltpu

# ------------------------- small GPT-NeoX-like config -------------------------
HIDDEN = 128
NUM_HEADS = 4
HEAD_SIZE = HIDDEN // NUM_HEADS           # 32
ROTARY_PCT = 0.25
ROTARY_DIM = int(HEAD_SIZE * ROTARY_PCT)  # 8 (must be even)
ROPE_THETA = 10000.0
SEQ = 8
SCALE = HEAD_SIZE ** (-0.5)


# ------------------------------ fused kernel ----------------------------------
def _fused_gpt_neox_attn_kernel(x_ref, wqkv_ref, bqkv_ref, wd_ref, bd_ref,
                                cos_ref, sin_ref, o_ref, *,
                                num_heads, head_size, rotary_dim, seq, scale):
    # x:(S,H*D) f32   wqkv:(H*D,3*H*D) bf16   bqkv:(1,3*H*D) f32
    # wd:(H*D,H*D) bf16   bd:(1,H*D) f32
    # cos/sin:(S,H*D) f32, tiled per head; sin has -sin in the first rotary half,
    # +sin in the second rotary half and 0 outside the rotary dims.
    hid = num_heads * head_size
    half = rotary_dim // 2

    # 1) QKV projection: bf16 operands on the MXU, f32 accumulation.
    x_bf = x_ref[...].astype(jnp.bfloat16)
    qkv = jnp.dot(x_bf, wqkv_ref[...], preferred_element_type=jnp.float32) + bqkv_ref[...]
    q = qkv[:, :hid] * scale                 # head_size**-0.5 folded once (1 VPU mul)
    k = qkv[:, hid:2 * hid]
    v = qkv[:, 2 * hid:]

    # 2) NeoX rotary, token-major over all heads at once.
    #    rotate-half = two XLU lane rolls + select (no perm matmul, no extra tables).
    cos_t = cos_ref[...]
    sin_t = sin_ref[...]
    lane = lax.broadcasted_iota(jnp.int32, (seq, hid), 1)
    first_half = (lane % head_size) < half    # lanes needing x2 (the +half neighbour)

    def rope(t):
        fwd = pltpu.roll(t, shift=half, axis=1)         # fwd[i] = t[i - half] -> x1 at 2nd half
        bwd = pltpu.roll(t, shift=hid - half, axis=1)   # bwd[i] = t[i + half] -> x2 at 1st half
        # sin_t is 0 outside the rotary dims, so the rolled garbage there is harmless.
        return t * cos_t + jnp.where(first_half, bwd, fwd) * sin_t

    q = rope(q)
    k = rope(k)

    # 3) causal softmax attention per head, with the dense output projection
    #    folded into the head loop (f32 accumulator, no lane concat).
    row = lax.broadcasted_iota(jnp.int32, (seq, seq), 0)
    col = lax.broadcasted_iota(jnp.int32, (seq, seq), 1)
    causal = col <= row

    acc = jnp.zeros((seq, hid), jnp.float32)
    for h in range(num_heads):                # static unrolled (4 tiny heads)
        lo = h * head_size
        hi = lo + head_size
        q_h = q[:, lo:hi]                     # (S, D)
        k_h = k[:, lo:hi]
        v_h = v[:, lo:hi]
        # q_h @ k_h^T without materializing a transpose (SCALE already applied).
        s = lax.dot_general(q_h, k_h, (((1,), (1,)), ((), ())),
                            preferred_element_type=jnp.float32)       # (S, S)
        s = jnp.where(causal, s, -1e30)       # diag always unmasked -> max-sub safe
        m = jnp.max(s, axis=-1, keepdims=True)
        p = jnp.exp(s - m)
        l = jnp.sum(p, axis=-1, keepdims=True)
        o_h = jnp.dot(p, v_h, preferred_element_type=jnp.float32) * pl.reciprocal(l, approx=False)
        # fused dense: static ref slice of the bf16 weight is a free view/load.
        acc = acc + jnp.dot(o_h.astype(jnp.bfloat16), wd_ref[lo:hi, :],
                            preferred_element_type=jnp.float32)
    # TODO(synk): at larger S, batch the 4 per-head score/PV matmuls into a single
    #             lane-dense tile before mask/softmax to cut XLU/EUP push count 4x.

    # 4) bias add and a single lane-dense (S, 128) store.
    o_ref[...] = (acc + bd_ref[...]).astype(o_ref.dtype)


# ------------------------------ rope tables ------------------------------------
def build_rope_tables(position_ids):
    """Token-major (S, HIDDEN) cos/sin tables, tiled over heads.

    Built ONCE at module-init time (in production: precomputed for max_position and
    gathered by position_ids), NOT in the per-call forward path.
    """
    half = ROTARY_DIM // 2
    inv_freq = 1.0 / (ROPE_THETA ** (jnp.arange(0, ROTARY_DIM, 2, dtype=jnp.float32) / ROTARY_DIM))
    freqs = position_ids.astype(jnp.float32)[:, None] * inv_freq[None, :]   # (S, half)
    cos = jnp.cos(freqs)
    sin = jnp.sin(freqs)

    S = position_ids.shape[0]
    cos_head = jnp.ones((S, HEAD_SIZE), jnp.float32)
    sin_head = jnp.zeros((S, HEAD_SIZE), jnp.float32)
    cos_head = cos_head.at[:, :half].set(cos).at[:, half:ROTARY_DIM].set(cos)
    sin_head = sin_head.at[:, :half].set(-sin).at[:, half:ROTARY_DIM].set(sin)

    cos_full = jnp.tile(cos_head, (1, NUM_HEADS))          # (S, HIDDEN)
    sin_full = jnp.tile(sin_head, (1, NUM_HEADS))
    return cos_full, sin_full


# --------------------------- full forward (wrapper) ----------------------------
def gpt_neox_attention_forward(hidden_states, w_qkv_bf16, b_qkv, w_dense_bf16, b_dense,
                               cos_full, sin_full):
    """Per-call path: exactly one pallas_call, no table/bias construction here."""
    S, hid = hidden_states.shape

    kern = functools.partial(_fused_gpt_neox_attn_kernel,
                             num_heads=NUM_HEADS, head_size=HEAD_SIZE,
                             rotary_dim=ROTARY_DIM, seq=S, scale=SCALE)

    full = lambda shape: pl.BlockSpec(shape, lambda i: (0, 0))
    return pl.pallas_call(
        kern,
        out_shape=jax.ShapeDtypeStruct((S, hid), hidden_states.dtype),
        grid=(1,),
        in_specs=[
            full((S, hid)),                 # x (f32)
            full((hid, 3 * hid)),           # w_qkv (bf16)
            full((1, 3 * hid)),             # b_qkv (f32)
            full((hid, hid)),               # w_dense (bf16)
            full((1, hid)),                 # b_dense (f32)
            full((S, hid)),                 # cos (f32)
            full((S, hid)),                 # sin (signed, f32)
        ],
        out_specs=full((S, hid)),
        compiler_params=pltpu.CompilerParams(dimension_semantics=("arbitrary",)),
    )(hidden_states, w_qkv_bf16, b_qkv, w_dense_bf16, b_dense, cos_full, sin_full)


# ------------------------------ plain-JAX reference -----------------------------
def reference_forward(position_ids, x, w_qkv, b_qkv, w_dense, b_dense):
    w_qkv = w_qkv.astype(jnp.float32)
    w_dense = w_dense.astype(jnp.float32)
    qkv = x @ w_qkv + b_qkv
    q, k, v = jnp.split(qkv, 3, axis=-1)
    S = x.shape[0]
    q = q.reshape(S, NUM_HEADS, HEAD_SIZE)
    k = k.reshape(S, NUM_HEADS, HEAD_SIZE)
    v = v.reshape(S, NUM_HEADS, HEAD_SIZE)

    half = ROTARY_DIM // 2
    inv_freq = 1.0 / (ROPE_THETA ** (jnp.arange(0, ROTARY_DIM, 2, dtype=jnp.float32) / ROTARY_DIM))
    freqs = position_ids.astype(jnp.float32)[:, None] * inv_freq[None, :]
    cos = jnp.cos(freqs)[:, None, :]
    sin = jnp.sin(freqs)[:, None, :]

    def rope(t):
        rot, pas = t[..., :ROTARY_DIM], t[..., ROTARY_DIM:]
        t1, t2 = rot[..., :half], rot[..., half:]
        return jnp.concatenate([t1 * cos - t2 * sin, t2 * cos + t1 * sin, pas], axis=-1)

    q, k = rope(q), rope(k)
    qh, kh, vh = (t.transpose(1, 0, 2) for t in (q, k, v))
    s = jnp.einsum("hqd,hkd->hqk", qh, kh) * SCALE
    mask = jnp.tril(jnp.ones((S, S), dtype=bool))
    s = jnp.where(mask[None], s, -1e30)
    p = jax.nn.softmax(s, axis=-1)
    o = jnp.einsum("hqk,hkd->hqd", p, vh).transpose(1, 0, 2).reshape(S, HIDDEN)
    return o @ w_dense + b_dense


# ----------------------------------- main ---------------------------------------
if __name__ == "__main__":
    key = jax.random.PRNGKey(0)
    k1, k2, k3, k4, k5 = jax.random.split(key, 5)

    hidden_states = jax.random.normal(k1, (SEQ, HIDDEN), jnp.float32)
    position_ids = jnp.arange(SEQ, dtype=jnp.int32)

    # Parameters (stored already transposed [in, out]); weights stored in bf16,
    # biases stored as (1, N) f32 — both done once at init, not per call.
    # NOTE: real HF/vLLM GPTNeoX query_key_value weights are interleaved per head
    # (heads, 3, head_size) and must be permuted to contiguous [Q|K|V] at load time.
    w_qkv = (0.02 * jax.random.normal(k2, (HIDDEN, 3 * HIDDEN), jnp.float32)).astype(jnp.bfloat16)
    b_qkv = (0.01 * jax.random.normal(k3, (1, 3 * HIDDEN), jnp.float32))
    w_dense = (0.02 * jax.random.normal(k4, (HIDDEN, HIDDEN), jnp.float32)).astype(jnp.bfloat16)
    b_dense = (0.01 * jax.random.normal(k5, (1, HIDDEN), jnp.float32))

    # Rope tables built once ("module init"), outside the per-call forward.
    cos_full, sin_full = build_rope_tables(position_ids)

    out = gpt_neox_attention_forward(hidden_states, w_qkv, b_qkv, w_dense, b_dense,
                                     cos_full, sin_full)
    out = jax.block_until_ready(out)

    ref = reference_forward(position_ids, hidden_states, w_qkv, b_qkv, w_dense, b_dense)
    assert out.shape == (SEQ, HIDDEN)
    assert jnp.allclose(out, ref, rtol=2e-2, atol=2e-2), "mismatch vs reference"

    print("KERNEL_OK")
</pallas_src>

<mosaic_0001>
module attributes {stable_mosaic.version = 11 : i64} {
  func.func @_fused_gpt_neox_attn_kernel(%arg0: i32, %arg1: memref<8x128xf32, #tpu.memory_space<vmem>>, %arg2: memref<128x384xbf16, #tpu.memory_space<vmem>>, %arg3: memref<1x384xf32, #tpu.memory_space<vmem>>, %arg4: memref<128x128xbf16, #tpu.memory_space<vmem>>, %arg5: memref<1x128xf32, #tpu.memory_space<vmem>>, %arg6: memref<8x128xf32, #tpu.memory_space<vmem>>, %arg7: memref<8x128xf32, #tpu.memory_space<vmem>>, %arg8: memref<8x128xf32, #tpu.memory_space<vmem>>) attributes {dimension_semantics = [#tpu.dimension_semantics<arbitrary>], iteration_bounds = array<i64: 1>, scalar_prefetch = 0 : i64, scratch_operands = 0 : i64, tpu.core_type = #tpu.core_type<tc>, window_params = [{pipeline_mode = #tpu.pipeline_mode<synchronous>, transform_indices = @transform_0, window_bounds = array<i64: 8, 128>}, {pipeline_mode = #tpu.pipeline_mode<synchronous>, transform_indices = @transform_1, window_bounds = array<i64: 128, 384>}, {pipeline_mode = #tpu.pipeline_mode<synchronous>, transform_indices = @transform_2, window_bounds = array<i64: 1, 384>}, {pipeline_mode = #tpu.pipeline_mode<synchronous>, transform_indices = @transform_3, window_bounds = array<i64: 128, 128>}, {pipeline_mode = #tpu.pipeline_mode<synchronous>, transform_indices = @transform_4, window_bounds = array<i64: 1, 128>}, {pipeline_mode = #tpu.pipeline_mode<synchronous>, transform_indices = @transform_5, window_bounds = array<i64: 8, 128>}, {pipeline_mode = #tpu.pipeline_mode<synchronous>, transform_indices = @transform_6, window_bounds = array<i64: 8, 128>}, {pipeline_mode = #tpu.pipeline_mode<synchronous>, transform_indices = @transform_7, window_bounds = array<i64: 8, 128>}]} {
    %c0 = arith.constant 0 : index
    %c0_0 = arith.constant 0 : index
    %0 = vector.load %arg1[%c0, %c0_0] : memref<8x128xf32, #tpu.memory_space<vmem>>, vector<8x128xf32>
    %1 = arith.truncf %0 : vector<8x128xf32> to vector<8x128xbf16>
    %c0_1 = arith.constant 0 : index
    %c0_2 = arith.constant 0 : index
    %2 = vector.load %arg2[%c0_1, %c0_2] : memref<128x384xbf16, #tpu.memory_space<vmem>>, vector<128x384xbf16>
    %cst = arith.constant dense<0.000000e+00> : vector<8x384xf32>
    %3 = tpu.matmul %1, %2, %cst {dimension_numbers = #tpu.dot_dimension_numbers<[1], [0], [0], [1], [0, 0, 1, 1], [], []>} : vector<8x128xbf16>, vector<128x384xbf16>, vector<8x384xf32> -> vector<8x384xf32>
    %c0_3 = arith.constant 0 : index
    %c0_4 = arith.constant 0 : index
    %4 = vector.load %arg3[%c0_3, %c0_4] : memref<1x384xf32, #tpu.memory_space<vmem>>, vector<1x384xf32>
    %5 = vector.broadcast %4 : vector<1x384xf32> to vector<8x384xf32>
    %6 = arith.addf %3, %5 : vector<8x384xf32>
    %7 = vector.extract_strided_slice %6 {offsets = [0, 0], sizes = [8, 128], strides = [1, 1]} : vector<8x384xf32> to vector<8x128xf32>
    %cst_5 = arith.constant 0.176776692 : f32
    %8 = vector.broadcast %cst_5 : f32 to vector<8x128xf32>
    %9 = arith.mulf %7, %8 : vector<8x128xf32>
    %10 = vector.extract_strided_slice %6 {offsets = [0, 128], sizes = [8, 128], strides = [1, 1]} : vector<8x384xf32> to vector<8x128xf32>
    %11 = vector.extract_strided_slice %6 {offsets = [0, 256], sizes = [8, 128], strides = [1, 1]} : vector<8x384xf32> to vector<8x128xf32>
    %c0_6 = arith.constant 0 : index
    %c0_7 = arith.constant 0 : index
    %12 = vector.load %arg6[%c0_6, %c0_7] : memref<8x128xf32, #tpu.memory_space<vmem>>, vector<8x128xf32>
    %c0_8 = arith.constant 0 : index
    %c0_9 = arith.constant 0 : index
    %13 = vector.load %arg7[%c0_8, %c0_9] : memref<8x128xf32, #tpu.memory_space<vmem>>, vector<8x128xf32>
    %14 = tpu.iota {dimensions = array<i32: 1>} : vector<8x128xi32>
    %c32_i32 = arith.constant 32 : i32
    %c0_i32 = arith.constant 0 : i32
    %15 = arith.cmpi eq, %c32_i32, %c0_i32 : i32
    %c1_i32 = arith.constant 1 : i32
    %16 = arith.select %15, %c1_i32, %c32_i32 : i32
    %17 = vector.broadcast %16 : i32 to vector<8x128xi32>
    %18 = arith.remsi %14, %17 : vector<8x128xi32>
    %c0_i32_10 = arith.constant 0 : i32
    %19 = vector.broadcast %c0_i32_10 : i32 to vector<8x128xi32>
    %20 = arith.cmpi ne, %18, %19 : vector<8x128xi32>
    %c0_i32_11 = arith.constant 0 : i32
    %21 = vector.broadcast %c0_i32_11 : i32 to vector<8x128xi32>
    %22 = arith.cmpi slt, %18, %21 : vector<8x128xi32>
    %c0_i32_12 = arith.constant 0 : i32
    %23 = arith.cmpi slt, %16, %c0_i32_12 : i32
    %24 = vector.broadcast %23 : i1 to vector<8x128xi1>
    %25 = vector.broadcast %24 : vector<8x128xi1> to vector<8x128xi1>
    %26 = arith.xori %22, %25 : vector<8x128xi1>
    %27 = arith.andi %26, %20 : vector<8x128xi1>
    %28 = vector.broadcast %16 : i32 to vector<8x128xi32>
    %29 = arith.addi %18, %28 : vector<8x128xi32>
    %30 = arith.select %27, %29, %18 : vector<8x128xi1>, vector<8x128xi32>
    %c4_i32 = arith.constant 4 : i32
    %31 = vector.broadcast %c4_i32 : i32 to vector<8x128xi32>
    %32 = arith.cmpi slt, %30, %31 : vector<8x128xi32>
    %c4_i32_13 = arith.constant 4 : i32
    %33 = tpu.dynamic_rotate %9 by %c4_i32_13 dim 1 : vector<8x128xf32>, i32 -> vector<8x128xf32>
    %c124_i32 = arith.constant 124 : i32
    %34 = tpu.dynamic_rotate %9 by %c124_i32 dim 1 : vector<8x128xf32>, i32 -> vector<8x128xf32>
    %35 = arith.mulf %9, %12 : vector<8x128xf32>
    %36 = arith.select %32, %34, %33 : vector<8x128xi1>, vector<8x128xf32>
    %37 = arith.mulf %36, %13 : vector<8x128xf32>
    %38 = arith.addf %35, %37 : vector<8x128xf32>
    %c4_i32_14 = arith.constant 4 : i32
    %39 = tpu.dynamic_rotate %10 by %c4_i32_14 dim 1 : vector<8x128xf32>, i32 -> vector<8x128xf32>
    %c124_i32_15 = arith.constant 124 : i32
    %40 = tpu.dynamic_rotate %10 by %c124_i32_15 dim 1 : vector<8x128xf32>, i32 -> vector<8x128xf32>
    %41 = arith.mulf %10, %12 : vector<8x128xf32>
    %42 = arith.select %32, %40, %39 : vector<8x128xi1>, vector<8x128xf32>
    %43 = arith.mulf %42, %13 : vector<8x128xf32>
    %44 = arith.addf %41, %43 : vector<8x128xf32>
    %45 = tpu.iota {dimensions = array<i32: 0>} : vector<8x8xi32>
    %46 = tpu.iota {dimensions = array<i32: 1>} : vector<8x8xi32>
    %47 = arith.cmpi sle, %46, %45 : vector<8x8xi32>
    %cst_16 = arith.constant 0.000000e+00 : f32
    %48 = vector.broadcast %cst_16 : f32 to vector<8x128xf32>
    %49 = vector.extract_strided_slice %38 {offsets = [0, 0], sizes = [8, 32], strides = [1, 1]} : vector<8x128xf32> to vector<8x32xf32>
    %50 = vector.extract_strided_slice %44 {offsets = [0, 0], sizes = [8, 32], strides = [1, 1]} : vector<8x128xf32> to vector<8x32xf32>
    %51 = vector.extract_strided_slice %11 {offsets = [0, 0], sizes = [8, 32], strides = [1, 1]} : vector<8x128xf32> to vector<8x32xf32>
    %cst_17 = arith.constant dense<0.000000e+00> : vector<8x8xf32>
    %52 = tpu.matmul %49, %50, %cst_17 {dimension_numbers = #tpu.dot_dimension_numbers<[1], [1], [0], [0], [0, 0, 1, 0], [], []>} : vector<8x32xf32>, vector<8x32xf32>, vector<8x8xf32> -> vector<8x8xf32>
    %cst_18 = arith.constant -1.000000e+30 : f32
    %53 = vector.broadcast %cst_18 : f32 to vector<8x8xf32>
    %54 = arith.select %47, %52, %53 : vector<8x8xi1>, vector<8x8xf32>
    %cst_19 = arith.constant dense<0xFF800000> : vector<8xf32>
    %55 = vector.multi_reduction <maximumf>, %54, %cst_19 [1] : vector<8x8xf32> to vector<8xf32>
    %56 = vector.shape_cast %55 : vector<8xf32> to vector<8x1xf32>
    %57 = vector.broadcast %56 : vector<8x1xf32> to vector<8x8xf32>
    %58 = arith.subf %54, %57 : vector<8x8xf32>
    %59 = math.exp %58 : vector<8x8xf32>
    %cst_20 = arith.constant dense<0.000000e+00> : vector<8xf32>
    %60 = vector.multi_reduction <add>, %59, %cst_20 [1] : vector<8x8xf32> to vector<8xf32>
    %61 = vector.shape_cast %60 : vector<8xf32> to vector<8x1xf32>
    %cst_21 = arith.constant dense<0.000000e+00> : vector<8x32xf32>
    %62 = tpu.matmul %59, %51, %cst_21 {dimension_numbers = #tpu.dot_dimension_numbers<[1], [0], [0], [1], [0, 0, 1, 1], [], []>} : vector<8x8xf32>, vector<8x32xf32>, vector<8x32xf32> -> vector<8x32xf32>
    %63 = tpu.reciprocal %61 : vector<8x1xf32> -> vector<8x1xf32>
    %64 = vector.broadcast %63 : vector<8x1xf32> to vector<8x32xf32>
    %65 = arith.mulf %62, %64 : vector<8x32xf32>
    %66 = arith.truncf %65 : vector<8x32xf32> to vector<8x32xbf16>
    %c0_22 = arith.constant 0 : index
    %c0_23 = arith.constant 0 : index
    %67 = vector.load %arg4[%c0_22, %c0_23] : memref<128x128xbf16, #tpu.memory_space<vmem>>, vector<32x128xbf16>
    %cst_24 = arith.constant dense<0.000000e+00> : vector<8x128xf32>
    %68 = tpu.matmul %66, %67, %cst_24 {dimension_numbers = #tpu.dot_dimension_numbers<[1], [0], [0], [1], [0, 0, 1, 1], [], []>} : vector<8x32xbf16>, vector<32x128xbf16>, vector<8x128xf32> -> vector<8x128xf32>
    %69 = arith.addf %48, %68 : vector<8x128xf32>
    %70 = vector.extract_strided_slice %38 {offsets = [0, 32], sizes = [8, 32], strides = [1, 1]} : vector<8x128xf32> to vector<8x32xf32>
    %71 = vector.extract_strided_slice %44 {offsets = [0, 32], sizes = [8, 32], strides = [1, 1]} : vector<8x128xf32> to vector<8x32xf32>
    %72 = vector.extract_strided_slice %11 {offsets = [0, 32], sizes = [8, 32], strides = [1, 1]} : vector<8x128xf32> to vector<8x32xf32>
    %cst_25 = arith.constant dense<0.000000e+00> : vector<8x8xf32>
    %73 = tpu.matmul %70, %71, %cst_25 {dimension_numbers = #tpu.dot_dimension_numbers<[1], [1], [0], [0], [0, 0, 1, 0], [], []>} : vector<8x32xf32>, vector<8x32xf32>, vector<8x8xf32> -> vector<8x8xf32>
    %cst_26 = arith.constant -1.000000e+30 : f32
    %74 = vector.broadcast %cst_26 : f32 to vector<8x8xf32>
    %75 = arith.select %47, %73, %74 : vector<8x8xi1>, vector<8x8xf32>
    %cst_27 = arith.constant dense<0xFF800000> : vector<8xf32>
    %76 = vector.multi_reduction <maximumf>, %75, %cst_27 [1] : vector<8x8xf32> to vector<8xf32>
    %77 = vector.shape_cast %76 : vector<8xf32> to vector<8x1xf32>
    %78 = vector.broadcast %77 : vector<8x1xf32> to vector<8x8xf32>
    %79 = arith.subf %75, %78 : vector<8x8xf32>
    %80 = math.exp %79 : vector<8x8xf32>
    %cst_28 = arith.constant dense<0.000000e+00> : vector<8xf32>
    %81 = vector.multi_reduction <add>, %80, %cst_28 [1] : vector<8x8xf32> to vector<8xf32>
    %82 = vector.shape_cast %81 : vector<8xf32> to vector<8x1xf32>
    %cst_29 = arith.constant dense<0.000000e+00> : vector<8x32xf32>
    %83 = tpu.matmul %80, %72, %cst_29 {dimension_numbers = #tpu.dot_dimension_numbers<[1], [0], [0], [1], [0, 0, 1, 1], [], []>} : vector<8x8xf32>, vector<8x32xf32>, vector<8x32xf32> -> vector<8x32xf32>
    %84 = tpu.reciprocal %82 : vector<8x1xf32> -> vector<8x1xf32>
    %85 = vector.broadcast %84 : vector<8x1xf32> to vector<8x32xf32>
    %86 = arith.mulf %83, %85 : vector<8x32xf32>
    %87 = arith.truncf %86 : vector<8x32xf32> to vector<8x32xbf16>
    %c32 = arith.constant 32 : index
    %c0_30 = arith.constant 0 : index
    %88 = vector.load %arg4[%c32, %c0_30] : memref<128x128xbf16, #tpu.memory_space<vmem>>, vector<32x128xbf16>
    %cst_31 = arith.constant dense<0.000000e+00> : vector<8x128xf32>
    %89 = tpu.matmul %87, %88, %cst_31 {dimension_numbers = #tpu.dot_dimension_numbers<[1], [0], [0], [1], [0, 0, 1, 1], [], []>} : vector<8x32xbf16>, vector<32x128xbf16>, vector<8x128xf32> -> vector<8x128xf32>
    %90 = arith.addf %69, %89 : vector<8x128xf32>
    %91 = vector.extract_strided_slice %38 {offsets = [0, 64], sizes = [8, 32], strides = [1, 1]} : vector<8x128xf32> to vector<8x32xf32>
    %92 = vector.extract_strided_slice %44 {offsets = [0, 64], sizes = [8, 32], strides = [1, 1]} : vector<8x128xf32> to vector<8x32xf32>
    %93 = vector.extract_strided_slice %11 {offsets = [0, 64], sizes = [8, 32], strides = [1, 1]} : vector<8x128xf32> to vector<8x32xf32>
    %cst_32 = arith.constant dense<0.000000e+00> : vector<8x8xf32>
    %94 = tpu.matmul %91, %92, %cst_32 {dimension_numbers = #tpu.dot_dimension_numbers<[1], [1], [0], [0], [0, 0, 1, 0], [], []>} : vector<8x32xf32>, vector<8x32xf32>, vector<8x8xf32> -> vector<8x8xf32>
    %cst_33 = arith.constant -1.000000e+30 : f32
    %95 = vector.broadcast %cst_33 : f32 to vector<8x8xf32>
    %96 = arith.select %47, %94, %95 : vector<8x8xi1>, vector<8x8xf32>
    %cst_34 = arith.constant dense<0xFF800000> : vector<8xf32>
    %97 = vector.multi_reduction <maximumf>, %96, %cst_34 [1] : vector<8x8xf32> to vector<8xf32>
    %98 = vector.shape_cast %97 : vector<8xf32> to vector<8x1xf32>
    %99 = vector.broadcast %98 : vector<8x1xf32> to vector<8x8xf32>
    %100 = arith.subf %96, %99 : vector<8x8xf32>
    %101 = math.exp %100 : vector<8x8xf32>
    %cst_35 = arith.constant dense<0.000000e+00> : vector<8xf32>
    %102 = vector.multi_reduction <add>, %101, %cst_35 [1] : vector<8x8xf32> to vector<8xf32>
    %103 = vector.shape_cast %102 : vector<8xf32> to vector<8x1xf32>
    %cst_36 = arith.constant dense<0.000000e+00> : vector<8x32xf32>
    %104 = tpu.matmul %101, %93, %cst_36 {dimension_numbers = #tpu.dot_dimension_numbers<[1], [0], [0], [1], [0, 0, 1, 1], [], []>} : vector<8x8xf32>, vector<8x32xf32>, vector<8x32xf32> -> vector<8x32xf32>
    %105 = tpu.reciprocal %103 : vector<8x1xf32> -> vector<8x1xf32>
    %106 = vector.broadcast %105 : vector<8x1xf32> to vector<8x32xf32>
    %107 = arith.mulf %104, %106 : vector<8x32xf32>
    %108 = arith.truncf %107 : vector<8x32xf32> to vector<8x32xbf16>
    %c64 = arith.constant 64 : index
    %c0_37 = arith.constant 0 : index
    %109 = vector.load %arg4[%c64, %c0_37] : memref<128x128xbf16, #tpu.memory_space<vmem>>, vector<32x128xbf16>
    %cst_38 = arith.constant dense<0.000000e+00> : vector<8x128xf32>
    %110 = tpu.matmul %108, %109, %cst_38 {dimension_numbers = #tpu.dot_dimension_numbers<[1], [0], [0], [1], [0, 0, 1, 1], [], []>} : vector<8x32xbf16>, vector<32x128xbf16>, vector<8x128xf32> -> vector<8x128xf32>
    %111 = arith.addf %90, %110 : vector<8x128xf32>
    %112 = vector.extract_strided_slice %38 {offsets = [0, 96], sizes = [8, 32], strides = [1, 1]} : vector<8x128xf32> to vector<8x32xf32>
    %113 = vector.extract_strided_slice %44 {offsets = [0, 96], sizes = [8, 32], strides = [1, 1]} : vector<8x128xf32> to vector<8x32xf32>
    %114 = vector.extract_strided_slice %11 {offsets = [0, 96], sizes = [8, 32], strides = [1, 1]} : vector<8x128xf32> to vector<8x32xf32>
    %cst_39 = arith.constant dense<0.000000e+00> : vector<8x8xf32>
    %115 = tpu.matmul %112, %113, %cst_39 {dimension_numbers = #tpu.dot_dimension_numbers<[1], [1], [0], [0], [0, 0, 1, 0], [], []>} : vector<8x32xf32>, vector<8x32xf32>, vector<8x8xf32> -> vector<8x8xf32>
    %cst_40 = arith.constant -1.000000e+30 : f32
    %116 = vector.broadcast %cst_40 : f32 to vector<8x8xf32>
    %117 = arith.select %47, %115, %116 : vector<8x8xi1>, vector<8x8xf32>
    %cst_41 = arith.constant dense<0xFF800000> : vector<8xf32>
    %118 = vector.multi_reduction <maximumf>, %117, %cst_41 [1] : vector<8x8xf32> to vector<8xf32>
    %119 = vector.shape_cast %118 : vector<8xf32> to vector<8x1xf32>
    %120 = vector.broadcast %119 : vector<8x1xf32> to vector<8x8xf32>
    %121 = arith.subf %117, %120 : vector<8x8xf32>
    %122 = math.exp %121 : vector<8x8xf32>
    %cst_42 = arith.constant dense<0.000000e+00> : vector<8xf32>
    %123 = vector.multi_reduction <add>, %122, %cst_42 [1] : vector<8x8xf32> to vector<8xf32>
    %124 = vector.shape_cast %123 : vector<8xf32> to vector<8x1xf32>
    %cst_43 = arith.constant dense<0.000000e+00> : vector<8x32xf32>
    %125 = tpu.matmul %122, %114, %cst_43 {dimension_numbers = #tpu.dot_dimension_numbers<[1], [0], [0], [1], [0, 0, 1, 1], [], []>} : vector<8x8xf32>, vector<8x32xf32>, vector<8x32xf32> -> vector<8x32xf32>
    %126 = tpu.reciprocal %124 : vector<8x1xf32> -> vector<8x1xf32>
    %127 = vector.broadcast %126 : vector<8x1xf32> to vector<8x32xf32>
    %128 = arith.mulf %125, %127 : vector<8x32xf32>
    %129 = arith.truncf %128 : vector<8x32xf32> to vector<8x32xbf16>
    %c96 = arith.constant 96 : index
    %c0_44 = arith.constant 0 : index
    %130 = vector.load %arg4[%c96, %c0_44] : memref<128x128xbf16, #tpu.memory_space<vmem>>, vector<32x128xbf16>
    %cst_45 = arith.constant dense<0.000000e+00> : vector<8x128xf32>
    %131 = tpu.matmul %129, %130, %cst_45 {dimension_numbers = #tpu.dot_dimension_numbers<[1], [0], [0], [1], [0, 0, 1, 1], [], []>} : vector<8x32xbf16>, vector<32x128xbf16>, vector<8x128xf32> -> vector<8x128xf32>
    %132 = arith.addf %111, %131 : vector<8x128xf32>
    %c0_46 = arith.constant 0 : index
    %c0_47 = arith.constant 0 : index
    %133 = vector.load %arg5[%c0_46, %c0_47] : memref<1x128xf32, #tpu.memory_space<vmem>>, vector<1x128xf32>
    %134 = vector.broadcast %133 : vector<1x128xf32> to vector<8x128xf32>
    %135 = arith.addf %132, %134 : vector<8x128xf32>
    %c0_48 = arith.constant 0 : index
    %c0_49 = arith.constant 0 : index
    %136 = vector.load %arg8[%c0_48, %c0_49] : memref<8x128xf32, #tpu.memory_space<vmem>>, vector<8x128xf32>
    tpu.vector_store %arg8[%c0_48, %c0_49], %135 {strides = array<i32>} : memref<8x128xf32, #tpu.memory_space<vmem>>, vector<8x128xf32>,
    return
  }
  func.func @transform_0(%arg0: i32) -> (i32, i32) {
    %c0_i32 = arith.constant 0 : i32
    %c0_i32_0 = arith.constant 0 : i32
    %c0_i32_1 = arith.constant 0 : i32
    return %c0_i32, %c0_i32_0 : i32, i32
  }
  func.func @transform_1(%arg0: i32) -> (i32, i32) {
    %c0_i32 = arith.constant 0 : i32
    %c0_i32_0 = arith.constant 0 : i32
    %c0_i32_1 = arith.constant 0 : i32
    return %c0_i32, %c0_i32_0 : i32, i32
  }
  func.func @transform_2(%arg0: i32) -> (i32, i32) {
    %c0_i32 = arith.constant 0 : i32
    %c0_i32_0 = arith.constant 0 : i32
    %c0_i32_1 = arith.constant 0 : i32
    return %c0_i32, %c0_i32_0 : i32, i32
  }
  func.func @transform_3(%arg0: i32) -> (i32, i32) {
    %c0_i32 = arith.constant 0 : i32
    %c0_i32_0 = arith.constant 0 : i32
    %c0_i32_1 = arith.constant 0 : i32
    return %c0_i32, %c0_i32_0 : i32, i32
  }
  func.func @transform_4(%arg0: i32) -> (i32, i32) {
    %c0_i32 = arith.constant 0 : i32
    %c0_i32_0 = arith.constant 0 : i32
    %c0_i32_1 = arith.constant 0 : i32
    return %c0_i32, %c0_i32_0 : i32, i32
  }
  func.func @transform_5(%arg0: i32) -> (i32, i32) {
    %c0_i32 = arith.constant 0 : i32
    %c0_i32_0 = arith.constant 0 : i32
    %c0_i32_1 = arith.constant 0 : i32
    return %c0_i32, %c0_i32_0 : i32, i32
  }
  func.func @transform_6(%arg0: i32) -> (i32, i32) {
    %c0_i32 = arith.constant 0 : i32
    %c0_i32_0 = arith.constant 0 : i32
    %c0_i32_1 = arith.constant 0 : i32
    return %c0_i32, %c0_i32_0 : i32, i32
  }
  func.func @transform_7(%arg0: i32) -> (i32, i32) {
    %c0_i32 = arith.constant 0 : i32
    %c0_i32_0 = arith.constant 0 : i32
    %c0_i32_1 = arith.constant 0 : i32
    return %c0_i32, %c0_i32_0 : i32, i32
  }
}

</mosaic_0001>

<llo_original>
// kernel: tpu_custom_call.1
$region0: #{tpu_custom_call.1}
  #allocation0 [shape = 'u32[]', space=smem, size = 0x4, offset = 0x4, fixed_abs, tag = 'smem constant byte address 0x4 - core index']
  #allocation1 [shape = 'u32[144,128]{1,0:T(1,128)}', space=vmem, size = 0x12000, scoped, tag = 'internal scratch']
  %s0 = inlined_call_operand.hbm [shape: f32[8,128], index: 0, kind: input, shape index: {}]
  %s1 = inlined_call_operand.hbm [shape: bf16[128,384], index: 1, kind: input, shape index: {}]
  %s2 = inlined_call_operand.hbm [shape: f32[1,384], index: 2, kind: input, shape index: {}]
  %s3 = inlined_call_operand.hbm [shape: bf16[128,128], index: 3, kind: input, shape index: {}]
  %s4 = inlined_call_operand.vmem [shape: f32[1,128], index: 4, kind: input, shape index: {}]
  %s5 = inlined_call_operand.vmem [shape: f32[8,128], index: 5, kind: input, shape index: {}]
  %s6 = inlined_call_operand.hbm [shape: f32[8,128], index: 6, kind: input, shape index: {}]
  %s7 = inlined_call_operand.hbm [shape: f32[8,128], index: 7, kind: output, shape index: {}]
  %s8 = sld [smem:[#allocation0]]
  $region58: #{tpu_custom_call.1} parent=0
    _
  %s10 = ssub.s32 1, %s8
  %s11 = scalar_select 0, %s10, %s8
  $region1: #{tpu_custom_call.1} parent=0
    #allocation2 [shape = 'u8[4096]{0}', space=vmem, size = 0x1000, scoped, tag = 'input window, operand 0, single buffered']
    #allocation3 [shape = 's32[1]{0}', space=sflag, size = 0x4, scoped, tag = 'scoped memory for tpu_custom_call.1']
    #allocation4 [shape = 's32[1]{0}', space=sflag, size = 0x4, scoped, tag = 'scoped memory for tpu_custom_call.1']
    #allocation5 [shape = 'u8[98304]{0}', space=vmem, size = 0x18000, scoped, tag = 'input window, operand 1, single buffered']
    #allocation6 [shape = 's32[1]{0}', space=sflag, size = 0x4, scoped, tag = 'scoped memory for tpu_custom_call.1']
    #allocation7 [shape = 'u8[1536]{0}', space=vmem, size = 0x800, scoped, tag = 'input window, operand 2, single buffered']
    #allocation8 [shape = 'u8[32768]{0}', space=vmem, size = 0x8000, scoped, tag = 'input window, operand 3, single buffered']
    #allocation9 [shape = 's32[1]{0}', space=sflag, size = 0x4, scoped, tag = 'scoped memory for tpu_custom_call.1']
    #allocation10 [shape = 'u8[4096]{0}', space=vmem, size = 0x1000, scoped, tag = 'input window, operand 6, single buffered']
    #allocation11 [shape = 'u8[4096]{0}', space=vmem, size = 0x1000, scoped, tag = 'output window, operand 0, single buffered']
    %12 = vsyncpa [#allocation3], 0
    %13 = vsyncpa [#allocation6], 0
    %14 = vsyncpa [#allocation9], 0
    %15 = vsyncpa [#allocation4], 0
    // Predicated region
    $region2: #{tpu_custom_call.1} parent=1 // pred_check
      _
    $region3: #{tpu_custom_call.1} parent=1 // pred_check_branch
      %17 = sbr.rel (0) target = $region5
    $region4: #{tpu_custom_call.1} parent=1 // pred_region
      %s19 = ssub.s32 128, 128
      %20 = vsyncadd [#allocation3], %s19
      %s22 = sshll.u32 [#allocation2], 4
      %s23 = int_to_ptr.vmem [resolvable:$true] %s22
      %25 = dma.hbm_to_vmem [thread:$0]  %s0, 128, %s23, [#allocation3]
    $region5: #{tpu_custom_call.1} parent=1 // pred_fallthru
      _
    // Predicated region
    $region6: #{tpu_custom_call.1} parent=1 // pred_check
      _
    $region7: #{tpu_custom_call.1} parent=1 // pred_check_branch
      %27 = sbr.rel (0) target = $region9
    $region8: #{tpu_custom_call.1} parent=1 // pred_region
      %s29 = ssub.s32 3072, 3072
      %30 = vsyncadd [#allocation6], %s29
      %s31 = sshll.u32 [#allocation5], 4
      %s32 = int_to_ptr.vmem [resolvable:$true] %s31
      %37 = dma.hbm_to_vmem [thread:$0]  %s1, 3072, %s32, [#allocation6], 192, 192, 12
    $region9: #{tpu_custom_call.1} parent=1 // pred_fallthru
      _
    // Predicated region
    $region10: #{tpu_custom_call.1} parent=1 // pred_check
      _
    $region11: #{tpu_custom_call.1} parent=1 // pred_check_branch
      %39 = sbr.rel (0) target = $region13
    $region12: #{tpu_custom_call.1} parent=1 // pred_region
      %s41 = ssub.s32 48, 48
      %42 = vsyncadd [#allocation6], %s41
      %s44 = sshll.u32 [#allocation7], 4
      %s45 = int_to_ptr.vmem [resolvable:$true] %s44
      %47 = dma.hbm_to_vmem [thread:$0]  %s2, 48, %s45, [#allocation6]
    $region13: #{tpu_custom_call.1} parent=1 // pred_fallthru
      _
    // Predicated region
    $region14: #{tpu_custom_call.1} parent=1 // pred_check
      _
    $region15: #{tpu_custom_call.1} parent=1 // pred_check_branch
      %49 = sbr.rel (0) target = $region17
    $region16: #{tpu_custom_call.1} parent=1 // pred_region
      %s51 = ssub.s32 1024, 1024
      %52 = vsyncadd [#allocation9], %s51
      %s53 = sshll.u32 [#allocation8], 4
      %s54 = int_to_ptr.vmem [resolvable:$true] %s53
      %59 = dma.hbm_to_vmem [thread:$0]  %s3, 1024, %s54, [#allocation9], 64, 64, 4
    $region17: #{tpu_custom_call.1} parent=1 // pred_fallthru
      _
    // Predicated region
    $region18: #{tpu_custom_call.1} parent=1 // pred_check
      _
    $region19: #{tpu_custom_call.1} parent=1 // pred_check_branch
      %61 = sbr.rel (0) target = $region21
    $region20: #{tpu_custom_call.1} parent=1 // pred_region
      _
    $region21: #{tpu_custom_call.1} parent=1 // pred_fallthru
      _
    // Predicated region
    $region22: #{tpu_custom_call.1} parent=1 // pred_check
      _
    $region23: #{tpu_custom_call.1} parent=1 // pred_check_branch
      %63 = sbr.rel (0) target = $region25
    $region24: #{tpu_custom_call.1} parent=1 // pred_region
      _
    $region25: #{tpu_custom_call.1} parent=1 // pred_fallthru
      _
    // Predicated region
    $region26: #{tpu_custom_call.1} parent=1 // pred_check
      _
    $region27: #{tpu_custom_call.1} parent=1 // pred_check_branch
      %65 = sbr.rel (0) target = $region29
    $region28: #{tpu_custom_call.1} parent=1 // pred_region
      %s67 = ssub.s32 128, 128
      %68 = vsyncadd [#allocation9], %s67
      %s70 = sshll.u32 [#allocation10], 4
      %s71 = int_to_ptr.vmem [resolvable:$true] %s70
      %73 = dma.hbm_to_vmem [thread:$0]  %s6, 128, %s71, [#allocation9]
    $region29: #{tpu_custom_call.1} parent=1 // pred_fallthru
      _
    // Predicated region
    $region30: #{tpu_custom_call.1} parent=1 // pred_check
      _
    $region31: #{tpu_custom_call.1} parent=1 // pred_check_branch
      %75 = sbr.rel (0) target = $region33
    $region32: #{tpu_custom_call.1} parent=1 // pred_region
      %76 = dma.done [#allocation3], 128
    $region33: #{tpu_custom_call.1} parent=1 // pred_fallthru
      _
    // Predicated region
    $region34: #{tpu_custom_call.1} parent=1 // pred_check
      _
    $region35: #{tpu_custom_call.1} parent=1 // pred_check_branch
      %78 = sbr.rel (0) target = $region37
    $region36: #{tpu_custom_call.1} parent=1 // pred_region
      %79 = dma.done [#allocation6], 3072
    $region37: #{tpu_custom_call.1} parent=1 // pred_fallthru
      _
    // Predicated region
    $region38: #{tpu_custom_call.1} parent=1 // pred_check
      _
    $region39: #{tpu_custom_call.1} parent=1 // pred_check_branch
      %81 = sbr.rel (0) target = $region41
    $region40: #{tpu_custom_call.1} parent=1 // pred_region
      %82 = dma.done [#allocation6], 48
    $region41: #{tpu_custom_call.1} parent=1 // pred_fallthru
      _
    // Predicated region
    $region42: #{tpu_custom_call.1} parent=1 // pred_check
      _
    $region43: #{tpu_custom_call.1} parent=1 // pred_check_branch
      %84 = sbr.rel (0) target = $region45
    $region44: #{tpu_custom_call.1} parent=1 // pred_region
      %85 = dma.done [#allocation9], 1024
    $region45: #{tpu_custom_call.1} parent=1 // pred_fallthru
      _
    // Predicated region
    $region46: #{tpu_custom_call.1} parent=1 // pred_check
      _
    $region47: #{tpu_custom_call.1} parent=1 // pred_check_branch
      %87 = sbr.rel (0) target = $region49
    $region48: #{tpu_custom_call.1} parent=1 // pred_region
      %88 = dma.done [#allocation9], 128
    $region49: #{tpu_custom_call.1} parent=1 // pred_fallthru
      _
    %v90 = vld [vmem:[#allocation2] sm:$0xff]
    %v91 = vpack.c.bf16 %v90, %v90
    %v92 = vld [vmem:[#allocation5] sm:$0xff]
    %v93 = vld [vmem:[#allocation5 + $0x8] sm:$0xf]
    %v94 = vld [vmem:[#allocation5 + $0xc] sm:$0xff]
    %v95 = vld [vmem:[#allocation5 + $0x14] sm:$0xf]
    %v96 = vld [vmem:[#allocation5 + $0x18] sm:$0xff]
    %v97 = vld [vmem:[#allocation5 + $0x20] sm:$0xf]
    %v98 = vld [vmem:[#allocation5 + $0x24] sm:$0xff]
    %v99 = vld [vmem:[#allocation5 + $0x2c] sm:$0xf]
    %v100 = vld [vmem:[#allocation5 + $0x30] sm:$0xff]
    %v101 = vld [vmem:[#allocation5 + $0x38] sm:$0xf]
    %v102 = vld [vmem:[#allocation5 + $0x3c] sm:$0xff]
    %v103 = vld [vmem:[#allocation5 + $0x44] sm:$0xf]
    %v104 = vld [vmem:[#allocation5 + $0x48] sm:$0xff]
    %v105 = vld [vmem:[#allocation5 + $0x50] sm:$0xf]
    %v106 = vld [vmem:[#allocation5 + $0x54] sm:$0xff]
    %v107 = vld [vmem:[#allocation5 + $0x5c] sm:$0xf]
    %v108 = vld [vmem:[#allocation5 + $0x60] sm:$0xff]
    %v109 = vld [vmem:[#allocation5 + $0x68] sm:$0xf]
    %v110 = vld [vmem:[#allocation5 + $0x6c] sm:$0xff]
    %v111 = vld [vmem:[#allocation5 + $0x74] sm:$0xf]
    %v112 = vld [vmem:[#allocation5 + $0x78] sm:$0xff]
    %v113 = vld [vmem:[#allocation5 + $0x80] sm:$0xf]
    %v114 = vld [vmem:[#allocation5 + $0x84] sm:$0xff]
    %v115 = vld [vmem:[#allocation5 + $0x8c] sm:$0xf]
    %v116 = vld [vmem:[#allocation5 + $0x90] sm:$0xff]
    %v117 = vld [vmem:[#allocation5 + $0x98] sm:$0xf]
    %v118 = vld [vmem:[#allocation5 + $0x9c] sm:$0xff]
    %v119 = vld [vmem:[#allocation5 + $0xa4] sm:$0xf]
    %v120 = vld [vmem:[#allocation5 + $0xa8] sm:$0xff]
    %v121 = vld [vmem:[#allocation5 + $0xb0] sm:$0xf]
    %v122 = vld [vmem:[#allocation5 + $0xb4] sm:$0xff]
    %v123 = vld [vmem:[#allocation5 + $0xbc] sm:$0xf]
    %v124 = vld [vmem:[#allocation7] sm:$0x7]
    %v126 = vlaneseq
    %v127 = vshrl.u32 %v126, 7
    %v128 = vsub.s32 0, %v127
    %v129 = vrot.slane %v124, %v128
    %v130 = vlaneseq
    %v131 = vshrl.u32 %v130, 7
    %v132 = vsub.s32 1, %v131
    %v133 = vrot.slane %v124, %v132
    %v134 = vlaneseq
    %v135 = vshrl.u32 %v134, 7
    %v136 = vsub.s32 2, %v135
    %v137 = vrot.slane %v124, %v136
    %v173 = vunpack.c.l.b16 %v92
    %v174 = vunpack.c.h.b16 %v92
    %v175 = vunpack.c.l.b16 %v93
    %v176 = vunpack.c.l.b16 %v94
    %v177 = vunpack.c.h.b16 %v94
    %v178 = vunpack.c.l.b16 %v95
    %v179 = vunpack.c.l.b16 %v96
    %v180 = vunpack.c.h.b16 %v96
    %v181 = vunpack.c.l.b16 %v97
    %v182 = vunpack.c.l.b16 %v98
    %v183 = vunpack.c.h.b16 %v98
    %v184 = vunpack.c.l.b16 %v99
    %v185 = vunpack.c.l.b16 %v100
    %v186 = vunpack.c.h.b16 %v100
    %v187 = vunpack.c.l.b16 %v101
    %v188 = vunpack.c.l.b16 %v102
    %v189 = vunpack.c.h.b16 %v102
    %v190 = vunpack.c.l.b16 %v103
    %v191 = vunpack.c.l.b16 %v104
    %v192 = vunpack.c.h.b16 %v104
    %v193 = vunpack.c.l.b16 %v105
    %v194 = vunpack.c.l.b16 %v106
    %v195 = vunpack.c.h.b16 %v106
    %v196 = vunpack.c.l.b16 %v107
    %v197 = vunpack.c.l.b16 %v108
    %v198 = vunpack.c.h.b16 %v108
    %v199 = vunpack.c.l.b16 %v109
    %v200 = vunpack.c.l.b16 %v110
    %v201 = vunpack.c.h.b16 %v110
    %v202 = vunpack.c.l.b16 %v111
    %v203 = vunpack.c.l.b16 %v112
    %v204 = vunpack.c.h.b16 %v112
    %v205 = vunpack.c.l.b16 %v113
    %v206 = vunpack.c.l.b16 %v114
    %v207 = vunpack.c.h.b16 %v114
    %v208 = vunpack.c.l.b16 %v115
    %v209 = vunpack.c.l.b16 %v116
    %v210 = vunpack.c.h.b16 %v116
    %v211 = vunpack.c.l.b16 %v117
    %v212 = vunpack.c.l.b16 %v118
    %v213 = vunpack.c.h.b16 %v118
    %v214 = vunpack.c.l.b16 %v119
    %v215 = vunpack.c.l.b16 %v120
    %v216 = vunpack.c.h.b16 %v120
    %v217 = vunpack.c.l.b16 %v121
    %v218 = vunpack.c.l.b16 %v122
    %v219 = vunpack.c.h.b16 %v122
    %v220 = vunpack.c.l.b16 %v123
    %v221 = vpack.c.b16 %v176, %v173
    %v222 = vpack.c.b16 %v177, %v174
    %v223 = vpack.c.b16 %v178, %v175
    %v224 = vpack.c.b16 %v182, %v179
    %v225 = vpack.c.b16 %v183, %v180
    %v226 = vpack.c.b16 %v184, %v181
    %v227 = vpack.c.b16 %v188, %v185
    %v228 = vpack.c.b16 %v189, %v186
    %v229 = vpack.c.b16 %v190, %v187
    %v230 = vpack.c.b16 %v194, %v191
    %v231 = vpack.c.b16 %v195, %v192
    %v232 = vpack.c.b16 %v196, %v193
    %v233 = vpack.c.b16 %v200, %v197
    %v234 = vpack.c.b16 %v201, %v198
    %v235 = vpack.c.b16 %v202, %v199
    %v236 = vpack.c.b16 %v206, %v203
    %v237 = vpack.c.b16 %v207, %v204
    %v238 = vpack.c.b16 %v208, %v205
    %v239 = vpack.c.b16 %v212, %v209
    %v240 = vpack.c.b16 %v213, %v210
    %v241 = vpack.c.b16 %v214, %v211
    %v242 = vpack.c.b16 %v218, %v215
    %v243 = vpack.c.b16 %v219, %v216
    %v244 = vpack.c.b16 %v220, %v217
    %269 = vmatprep.subr.bf16.mxu0 %v243
    %270 = vmatpush1.bf16.msra.mxu0 %v242
    %271 = vmatprep.subr.bf16.mxu0 %v240
    %272 = vmatpush1.bf16.msra.mxu0 %v239
    %273 = vmatprep.subr.bf16.mxu0 %v237
    %274 = vmatpush1.bf16.msra.mxu0 %v236
    %275 = vmatprep.subr.bf16.mxu0 %v234
    %276 = vmatpush1.bf16.msra.mxu0 %v233
    %277 = vmatprep.subr.bf16.mxu0 %v231
    %278 = vmatpush1.bf16.msra.mxu0 %v230
    %279 = vmatprep.subr.bf16.mxu0 %v228
    %280 = vmatpush1.bf16.msra.mxu0 %v227
    %281 = vmatprep.subr.bf16.mxu0 %v225
    %282 = vmatpush1.bf16.msra.mxu0 %v224
    %283 = vmatprep.subr.bf16.mxu0 %v222
    %284 = vmatpush1.bf16.msra.mxu0 %v221
    %285 = vmatprep.subr.bf16.mxu0 0
    %286 = vmatpush2.bf16.msra.mxu0 0
    %287 = vmatprep.subr.bf16.mxu0 0
    %288 = vmatpush2.bf16.msra.mxu0 0
    %289 = vmatprep.subr.bf16.mxu0 0
    %290 = vmatpush2.bf16.msra.mxu0 0
    %291 = vmatprep.subr.bf16.mxu0 0
    %292 = vmatpush2.bf16.msra.mxu0 0
    %293 = vmatprep.subr.bf16.mxu0 0
    %294 = vmatpush2.bf16.msra.mxu0 0
    %295 = vmatprep.subr.bf16.mxu0 0
    %296 = vmatpush2.bf16.msra.mxu0 0
    %297 = vmatprep.subr.bf16.mxu0 0
    %298 = vmatpush2.bf16.msra.mxu0 0
    %299 = vmatprep.subr.bf16.mxu0 0
    %300 = vmatpush2.bf16.msra.mxu0 0
    %301 = vmatprep.mubr.bf16.mxu0 0
    %302 = vmatmul.mubr.bf16.gmra.mxu0 %v91
    %v303 = vpop.f32.mrf.mxu0
    %v304 = vadd.f32 %v129, %v303
    %v305 = vpop.f32.mrf.mxu0
    %v306 = vadd.f32 %v133, %v305
    %v307 = vpop.f32.mrf.mxu0
    %v308 = vpop.f32.mrf.mxu0
    %309 = vdwg.mxu0
    %310 = vmatprep.subr.bf16.mxu0 0
    %311 = vmatpush1.bf16.msra.mxu0 %v244
    %312 = vmatprep.subr.bf16.mxu0 0
    %313 = vmatpush1.bf16.msra.mxu0 %v241
    %314 = vmatprep.subr.bf16.mxu0 0
    %315 = vmatpush1.bf16.msra.mxu0 %v238
    %316 = vmatprep.subr.bf16.mxu0 0
    %317 = vmatpush1.bf16.msra.mxu0 %v235
    %318 = vmatprep.subr.bf16.mxu0 0
    %319 = vmatpush1.bf16.msra.mxu0 %v232
    %320 = vmatprep.subr.bf16.mxu0 0
    %321 = vmatpush1.bf16.msra.mxu0 %v229
    %322 = vmatprep.subr.bf16.mxu0 0
    %323 = vmatpush1.bf16.msra.mxu0 %v226
    %324 = vmatprep.subr.bf16.mxu0 0
    %325 = vmatpush1.bf16.msra.mxu0 %v223
    %326 = vmatprep.subr.bf16.mxu0 0
    %327 = vmatpush2.bf16.msra.mxu0 0
    %328 = vmatprep.subr.bf16.mxu0 0
    %329 = vmatpush2.bf16.msra.mxu0 0
    %330 = vmatprep.subr.bf16.mxu0 0
    %331 = vmatpush2.bf16.msra.mxu0 0
    %332 = vmatprep.subr.bf16.mxu0 0
    %333 = vmatpush2.bf16.msra.mxu0 0
    %334 = vmatprep.subr.bf16.mxu0 0
    %335 = vmatpush2.bf16.msra.mxu0 0
    %336 = vmatprep.subr.bf16.mxu0 0
    %337 = vmatpush2.bf16.msra.mxu0 0
    %338 = vmatprep.subr.bf16.mxu0 0
    %339 = vmatpush2.bf16.msra.mxu0 0
    %340 = vmatprep.subr.bf16.mxu0 0
    %341 = vmatpush2.bf16.msra.mxu0 0
    %342 = vmatprep.mubr.bf16.mxu0 0
    %343 = vmatmul.mubr.bf16.gmra.mxu0 %v91
    %v344 = vpop.f32.mrf.mxu0
    %v345 = vadd.f32 %v137, %v344
    %v346 = vpop.f32.mrf.mxu0
    %v347 = vpop.f32.mrf.mxu0
    %v348 = vpop.f32.mrf.mxu0
    %349 = vdwg.mxu0
    %v350 = vmul.f32 %v304, 0.17677669
    %v351 = vld [vmem:[%s5] sm:$0xff]
    %v352 = vld [vmem:[#allocation10] sm:$0xff]
    %v353 = vlaneseq
    %v354 = vand.u32 %v353, 127
    %vm355 = vcmp.lt.s32.totalorder %v354, 0
    %v356 = vsub.s32 0, %v354
    %v357 = vsel %vm355, %v356, %v354
    %v358 = vshrl.u32 %v357, 5
    %v359 = vand.u32 %v357, 31
    %v360 = vsub.s32 0, %v359
    %v361 = vsel %vm355, %v360, %v359
    %vm362 = vcmp.ne.s32.totalorder %v361, 0
    %vm363 = vcmp.lt.s32.totalorder %v361, 0
    %vm364 = vmand %vm363, %vm362
    %v365 = vadd.s32 %v361, 32
    %v366 = vsel %vm364, %v365, %v361
    %vm367 = vcmp.lt.s32.totalorder %v366, 4
    %368 = vrot.lane.b32.xlu0 %v350, 4
    %v369 = vpop.permute.xlu0 %368
    %370 = vrot.lane.b32.xlu0 %v350, 124
    %v371 = vpop.permute.xlu0 %370
    %v372 = vmul.f32 %v350, %v351
    %v373 = vsel %vm367, %v371, %v369
    %v374 = vmul.f32 %v373, %v352
    %v375 = vadd.f32 %v372, %v374
    %376 = vrot.lane.b32.xlu0 %v306, 4
    %v377 = vpop.permute.xlu0 %376
    %378 = vrot.lane.b32.xlu0 %v306, 124
    %v379 = vpop.permute.xlu0 %378
    %v380 = vmul.f32 %v306, %v351
    %v381 = vsel %vm367, %v379, %v377
    %v382 = vmul.f32 %v381, %v352
    %v383 = vadd.f32 %v380, %v382
    %v384 = vlaneseq
    %v385 = vshrl.u32 %v384, 7
    %vm386 = vcmp.le.s32.totalorder %v354, %v385
    %vm387 = vcmask 261120
    %v389 = vsel %vm387, %v375, 0
    %v392 = vsel %vm387, %v383, 0
    %394 = vmatprep.subr.mxu0 0.0
    %395 = vmatpush1.xpose.msra.mxu0 0.0
    %396 = vmatprep.subr.mxu0 0.0
    %397 = vmatpush1.xpose.msra.mxu0 0.0
    %398 = vmatprep.subr.mxu0 0.0
    %399 = vmatpush1.xpose.msra.mxu0 0.0
    %400 = vmatprep.subr.mxu0 0.0
    %401 = vmatpush1.xpose.msra.mxu0 0.0
    %402 = vmatprep.subr.mxu0 0.0
    %403 = vmatpush1.xpose.msra.mxu0 0.0
    %404 = vmatprep.subr.mxu0 0.0
    %405 = vmatpush1.xpose.msra.mxu0 0.0
    %406 = vmatprep.subr.mxu0 0.0
    %407 = vmatpush1.xpose.msra.mxu0 0.0
    %408 = vmatprep.subr.mxu0 0.0
    %409 = vmatpush1.xpose.msra.mxu0 0.0
    %410 = vmatprep.subr.mxu0 0.0
    %411 = vmatpush1.xpose.msra.mxu0 0.0
    %412 = vmatprep.subr.mxu0 0.0
    %413 = vmatpush1.xpose.msra.mxu0 0.0
    %414 = vmatprep.subr.mxu0 0.0
    %415 = vmatpush1.xpose.msra.mxu0 0.0
    %416 = vmatprep.subr.mxu0 0.0
    %417 = vmatpush1.xpose.msra.mxu0 0.0
    %418 = vmatprep.subr.mxu0 0.0
    %419 = vmatpush1.xpose.msra.mxu0 0.0
    %420 = vmatprep.subr.mxu0 0.0
    %421 = vmatpush1.xpose.msra.mxu0 0.0
    %422 = vmatprep.subr.mxu0 0.0
    %423 = vmatpush1.xpose.msra.mxu0 0.0
    %424 = vmatprep.subr.mxu0 0.0
    %425 = vmatpush1.xpose.msra.mxu0 %v392
    %426 = vmatprep.subr.mxu0 0.0
    %427 = vmatpush2.xpose.msra.mxu0 0.0
    %428 = vmatprep.subr.mxu0 0.0
    %429 = vmatpush2.xpose.msra.mxu0 0.0
    %430 = vmatprep.subr.mxu0 0.0
    %431 = vmatpush2.xpose.msra.mxu0 0.0
    %432 = vmatprep.subr.mxu0 0.0
    %433 = vmatpush2.xpose.msra.mxu0 0.0
    %434 = vmatprep.subr.mxu0 0.0
    %435 = vmatpush2.xpose.msra.mxu0 0.0
    %436 = vmatprep.subr.mxu0 0.0
    %437 = vmatpush2.xpose.msra.mxu0 0.0
    %438 = vmatprep.subr.mxu0 0.0
    %439 = vmatpush2.xpose.msra.mxu0 0.0
    %440 = vmatprep.subr.mxu0 0.0
    %441 = vmatpush2.xpose.msra.mxu0 0.0
    %442 = vmatprep.subr.mxu0 0.0
    %443 = vmatpush2.xpose.msra.mxu0 0.0
    %444 = vmatprep.subr.mxu0 0.0
    %445 = vmatpush2.xpose.msra.mxu0 0.0
    %446 = vmatprep.subr.mxu0 0.0
    %447 = vmatpush2.xpose.msra.mxu0 0.0
    %448 = vmatprep.subr.mxu0 0.0
    %449 = vmatpush2.xpose.msra.mxu0 0.0
    %450 = vmatprep.subr.mxu0 0.0
    %451 = vmatpush2.xpose.msra.mxu0 0.0
    %452 = vmatprep.subr.mxu0 0.0
    %453 = vmatpush2.xpose.msra.mxu0 0.0
    %454 = vmatprep.subr.mxu0 0.0
    %455 = vmatpush2.xpose.msra.mxu0 0.0
    %456 = vmatprep.subr.mxu0 0.0
    %457 = vmatpush2.xpose.msra.mxu0 0.0
    %458 = vmatprep.mubr.f32.mxu0 0.0
    %459 = vmatmul.mubr.f32.gmra.mxu0 %v389
    %v460 = vpop.f32.mrf.mxu0
    %v461 = vadd.f32 0.0, %v460
    %v462 = vpop.f32.mrf.mxu0
    %463 = vdwg.mxu0
    %v464 = vsel %vm386, %v461, -1e+30
    %vm465 = vcmask 64512
    %v466 = vsel %vm465, %v464, -inf
    %467 = vmax.xlane.f32.xlu0 %v466
    %v468 = vpop.xlane.xlu0 %467
    %v469 = vsub.f32 %v464, %v468
    %v470 = vmul.f32 %v469, 1.442695
    %v471 = vpow.pop %v470
    %v472 = vsel %vm465, %v471, 0.0
    %473 = vadd.xlane.f32.xlu0 %v472
    %v474 = vpop.xlane.xlu0 %473
    %v476 = vsel %vm465, %v471, 0
    %478 = vmatprep.subr.mxu0 0.0
    %479 = vmatpush1.msra.mxu0 0.0
    %480 = vmatprep.subr.mxu0 0.0
    %481 = vmatpush1.msra.mxu0 0.0
    %482 = vmatprep.subr.mxu0 0.0
    %483 = vmatpush1.msra.mxu0 0.0
    %484 = vmatprep.subr.mxu0 0.0
    %485 = vmatpush1.msra.mxu0 0.0
    %486 = vmatprep.subr.mxu0 0.0
    %487 = vmatpush1.msra.mxu0 0.0
    %488 = vmatprep.subr.mxu0 0.0
    %489 = vmatpush1.msra.mxu0 0.0
    %490 = vmatprep.subr.mxu0 0.0
    %491 = vmatpush1.msra.mxu0 0.0
    %492 = vmatprep.subr.mxu0 0.0
    %493 = vmatpush1.msra.mxu0 0.0
    %494 = vmatprep.subr.mxu0 0.0
    %495 = vmatpush1.msra.mxu0 0.0
    %496 = vmatprep.subr.mxu0 0.0
    %497 = vmatpush1.msra.mxu0 0.0
    %498 = vmatprep.subr.mxu0 0.0
    %499 = vmatpush1.msra.mxu0 0.0
    %500 = vmatprep.subr.mxu0 0.0
    %501 = vmatpush1.msra.mxu0 0.0
    %502 = vmatprep.subr.mxu0 0.0
    %503 = vmatpush1.msra.mxu0 0.0
    %504 = vmatprep.subr.mxu0 0.0
    %505 = vmatpush1.msra.mxu0 0.0
    %506 = vmatprep.subr.mxu0 0.0
    %507 = vmatpush1.msra.mxu0 0.0
    %508 = vmatprep.subr.mxu0 0.0
    %509 = vmatpush1.msra.mxu0 %v345
    %510 = vmatprep.subr.mxu0 0.0
    %511 = vmatpush2.msra.mxu0 0.0
    %512 = vmatprep.subr.mxu0 0.0
    %513 = vmatpush2.msra.mxu0 0.0
    %514 = vmatprep.subr.mxu0 0.0
    %515 = vmatpush2.msra.mxu0 0.0
    %516 = vmatprep.subr.mxu0 0.0
    %517 = vmatpush2.msra.mxu0 0.0
    %518 = vmatprep.subr.mxu0 0.0
    %519 = vmatpush2.msra.mxu0 0.0
    %520 = vmatprep.subr.mxu0 0.0
    %521 = vmatpush2.msra.mxu0 0.0
    %522 = vmatprep.subr.mxu0 0.0
    %523 = vmatpush2.msra.mxu0 0.0
    %524 = vmatprep.subr.mxu0 0.0
    %525 = vmatpush2.msra.mxu0 0.0
    %526 = vmatprep.subr.mxu0 0.0
    %527 = vmatpush2.msra.mxu0 0.0
    %528 = vmatprep.subr.mxu0 0.0
    %529 = vmatpush2.msra.mxu0 0.0
    %530 = vmatprep.subr.mxu0 0.0
    %531 = vmatpush2.msra.mxu0 0.0
    %532 = vmatprep.subr.mxu0 0.0
    %533 = vmatpush2.msra.mxu0 0.0
    %534 = vmatprep.subr.mxu0 0.0
    %535 = vmatpush2.msra.mxu0 0.0
    %536 = vmatprep.subr.mxu0 0.0
    %537 = vmatpush2.msra.mxu0 0.0
    %538 = vmatprep.subr.mxu0 0.0
    %539 = vmatpush2.msra.mxu0 0.0
    %540 = vmatprep.subr.mxu0 0.0
    %541 = vmatpush2.msra.mxu0 0.0
    %542 = vmatprep.mubr.f32.mxu0 0.0
    %543 = vmatmul.mubr.f32.gmra.mxu0 %v476
    %v544 = vpop.f32.mrf.mxu0
    %v545 = vadd.f32 0.0, %v544
    %v546 = vpop.f32.mrf.mxu0
    %547 = vdwg.mxu0
    %v548 = vrcp.pop %v474
    %v549 = vmul.f32 %v545, %v548
    %v550 = vpack.c.bf16 %v549, %v549
    %v551 = vld [vmem:[#allocation8] sm:$0xf]
    %v552 = vld [vmem:[#allocation8 + $0x4] sm:$0xf]
    %v553 = vld [vmem:[#allocation8 + $0x8] sm:$0xf]
    %v554 = vld [vmem:[#allocation8 + $0xc] sm:$0xf]
    %555 = vrot.lane.b32.xlu0 %v375, 96
    %v556 = vpop.permute.xlu0 %555
    %557 = vrot.lane.b32.xlu0 %v383, 96
    %v558 = vpop.permute.xlu0 %557
    %v559 = vsel %vm387, %v556, 0
    %v561 = vsel %vm387, %v558, 0
    %563 = vmatprep.subr.mxu0 0.0
    %564 = vmatpush1.xpose.msra.mxu0 0.0
    %565 = vmatprep.subr.mxu0 0.0
    %566 = vmatpush1.xpose.msra.mxu0 0.0
    %567 = vmatprep.subr.mxu0 0.0
    %568 = vmatpush1.xpose.msra.mxu0 0.0
    %569 = vmatprep.subr.mxu0 0.0
    %570 = vmatpush1.xpose.msra.mxu0 0.0
    %571 = vmatprep.subr.mxu0 0.0
    %572 = vmatpush1.xpose.msra.mxu0 0.0
    %573 = vmatprep.subr.mxu0 0.0
    %574 = vmatpush1.xpose.msra.mxu0 0.0
    %575 = vmatprep.subr.mxu0 0.0
    %576 = vmatpush1.xpose.msra.mxu0 0.0
    %577 = vmatprep.subr.mxu0 0.0
    %578 = vmatpush1.xpose.msra.mxu0 0.0
    %579 = vmatprep.subr.mxu0 0.0
    %580 = vmatpush1.xpose.msra.mxu0 0.0
    %581 = vmatprep.subr.mxu0 0.0
    %582 = vmatpush1.xpose.msra.mxu0 0.0
    %583 = vmatprep.subr.mxu0 0.0
    %584 = vmatpush1.xpose.msra.mxu0 0.0
    %585 = vmatprep.subr.mxu0 0.0
    %586 = vmatpush1.xpose.msra.mxu0 0.0
    %587 = vmatprep.subr.mxu0 0.0
    %588 = vmatpush1.xpose.msra.mxu0 0.0
    %589 = vmatprep.subr.mxu0 0.0
    %590 = vmatpush1.xpose.msra.mxu0 0.0
    %591 = vmatprep.subr.mxu0 0.0
    %592 = vmatpush1.xpose.msra.mxu0 0.0
    %593 = vmatprep.subr.mxu0 0.0
    %594 = vmatpush1.xpose.msra.mxu0 %v561
    %595 = vmatprep.subr.mxu0 0.0
    %596 = vmatpush2.xpose.msra.mxu0 0.0
    %597 = vmatprep.subr.mxu0 0.0
    %598 = vmatpush2.xpose.msra.mxu0 0.0
    %599 = vmatprep.subr.mxu0 0.0
    %600 = vmatpush2.xpose.msra.mxu0 0.0
    %601 = vmatprep.subr.mxu0 0.0
    %602 = vmatpush2.xpose.msra.mxu0 0.0
    %603 = vmatprep.subr.mxu0 0.0
    %604 = vmatpush2.xpose.msra.mxu0 0.0
    %605 = vmatprep.subr.mxu0 0.0
    %606 = vmatpush2.xpose.msra.mxu0 0.0
    %607 = vmatprep.subr.mxu0 0.0
    %608 = vmatpush2.xpose.msra.mxu0 0.0
    %609 = vmatprep.subr.mxu0 0.0
    %610 = vmatpush2.xpose.msra.mxu0 0.0
    %611 = vmatprep.subr.mxu0 0.0
    %612 = vmatpush2.xpose.msra.mxu0 0.0
    %613 = vmatprep.subr.mxu0 0.0
    %614 = vmatpush2.xpose.msra.mxu0 0.0
    %615 = vmatprep.subr.mxu0 0.0
    %616 = vmatpush2.xpose.msra.mxu0 0.0
    %617 = vmatprep.subr.mxu0 0.0
    %618 = vmatpush2.xpose.msra.mxu0 0.0
    %619 = vmatprep.subr.mxu0 0.0
    %620 = vmatpush2.xpose.msra.mxu0 0.0
    %621 = vmatprep.subr.mxu0 0.0
    %622 = vmatpush2.xpose.msra.mxu0 0.0
    %623 = vmatprep.subr.mxu0 0.0
    %624 = vmatpush2.xpose.msra.mxu0 0.0
    %625 = vmatprep.subr.mxu0 0.0
    %626 = vmatpush2.xpose.msra.mxu0 0.0
    %627 = vmatprep.mubr.f32.mxu0 0.0
    %628 = vmatmul.mubr.f32.gmra.mxu0 %v559
    %v629 = vpop.f32.mrf.mxu0
    %v630 = vadd.f32 0.0, %v629
    %v631 = vpop.f32.mrf.mxu0
    %632 = vdwg.mxu0
    %v633 = vsel %vm386, %v630, -1e+30
    %v634 = vsel %vm465, %v633, -inf
    %635 = vmax.xlane.f32.xlu0 %v634
    %v636 = vpop.xlane.xlu0 %635
    %v637 = vsub.f32 %v633, %v636
    %v638 = vmul.f32 %v637, 1.442695
    %v639 = vpow.pop %v638
    %v640 = vsel %vm465, %v639, 0.0
    %641 = vadd.xlane.f32.xlu0 %v640
    %v642 = vpop.xlane.xlu0 %641
    %644 = vrot.lane.b32.xlu0 %v345, 96
    %v645 = vpop.permute.xlu0 %644
    %v648 = vsel %vm465, %v639, 0
    %650 = vmatprep.subr.mxu0 0.0
    %651 = vmatpush1.msra.mxu0 0.0
    %652 = vmatprep.subr.mxu0 0.0
    %653 = vmatpush1.msra.mxu0 0.0
    %654 = vmatprep.subr.mxu0 0.0
    %655 = vmatpush1.msra.mxu0 0.0
    %656 = vmatprep.subr.mxu0 0.0
    %657 = vmatpush1.msra.mxu0 0.0
    %658 = vmatprep.subr.mxu0 0.0
    %659 = vmatpush1.msra.mxu0 0.0
    %660 = vmatprep.subr.mxu0 0.0
    %661 = vmatpush1.msra.mxu0 0.0
    %662 = vmatprep.subr.mxu0 0.0
    %663 = vmatpush1.msra.mxu0 0.0
    %664 = vmatprep.subr.mxu0 0.0
    %665 = vmatpush1.msra.mxu0 0.0
    %666 = vmatprep.subr.mxu0 0.0
    %667 = vmatpush1.msra.mxu0 0.0
    %668 = vmatprep.subr.mxu0 0.0
    %669 = vmatpush1.msra.mxu0 0.0
    %670 = vmatprep.subr.mxu0 0.0
    %671 = vmatpush1.msra.mxu0 0.0
    %672 = vmatprep.subr.mxu0 0.0
    %673 = vmatpush1.msra.mxu0 0.0
    %674 = vmatprep.subr.mxu0 0.0
    %675 = vmatpush1.msra.mxu0 0.0
    %676 = vmatprep.subr.mxu0 0.0
    %677 = vmatpush1.msra.mxu0 0.0
    %678 = vmatprep.subr.mxu0 0.0
    %679 = vmatpush1.msra.mxu0 0.0
    %680 = vmatprep.subr.mxu0 0.0
    %681 = vmatpush1.msra.mxu0 %v645
    %682 = vmatprep.subr.mxu0 0.0
    %683 = vmatpush2.msra.mxu0 0.0
    %684 = vmatprep.subr.mxu0 0.0
    %685 = vmatpush2.msra.mxu0 0.0
    %686 = vmatprep.subr.mxu0 0.0
    %687 = vmatpush2.msra.mxu0 0.0
    %688 = vmatprep.subr.mxu0 0.0
    %689 = vmatpush2.msra.mxu0 0.0
    %690 = vmatprep.subr.mxu0 0.0
    %691 = vmatpush2.msra.mxu0 0.0
    %692 = vmatprep.subr.mxu0 0.0
    %693 = vmatpush2.msra.mxu0 0.0
    %694 = vmatprep.subr.mxu0 0.0
    %695 = vmatpush2.msra.mxu0 0.0
    %696 = vmatprep.subr.mxu0 0.0
    %697 = vmatpush2.msra.mxu0 0.0
    %698 = vmatprep.subr.mxu0 0.0
    %699 = vmatpush2.msra.mxu0 0.0
    %700 = vmatprep.subr.mxu0 0.0
    %701 = vmatpush2.msra.mxu0 0.0
    %702 = vmatprep.subr.mxu0 0.0
    %703 = vmatpush2.msra.mxu0 0.0
    %704 = vmatprep.subr.mxu0 0.0
    %705 = vmatpush2.msra.mxu0 0.0
    %706 = vmatprep.subr.mxu0 0.0
    %707 = vmatpush2.msra.mxu0 0.0
    %708 = vmatprep.subr.mxu0 0.0
    %709 = vmatpush2.msra.mxu0 0.0
    %710 = vmatprep.subr.mxu0 0.0
    %711 = vmatpush2.msra.mxu0 0.0
    %712 = vmatprep.subr.mxu0 0.0
    %713 = vmatpush2.msra.mxu0 0.0
    %714 = vmatprep.mubr.f32.mxu0 0.0
    %715 = vmatmul.mubr.f32.gmra.mxu0 %v648
    %v716 = vpop.f32.mrf.mxu0
    %v717 = vadd.f32 0.0, %v716
    %v718 = vpop.f32.mrf.mxu0
    %719 = vdwg.mxu0
    %v720 = vrcp.pop %v642
    %v721 = vmul.f32 %v717, %v720
    %v722 = vpack.c.bf16 %v721, %v721
    %v723 = vld [vmem:[#allocation8 + $0x10] sm:$0xf]
    %v724 = vld [vmem:[#allocation8 + $0x14] sm:$0xf]
    %v725 = vld [vmem:[#allocation8 + $0x18] sm:$0xf]
    %v726 = vld [vmem:[#allocation8 + $0x1c] sm:$0xf]
    %v731 = vunpack.c.l.b16 %v723
    %v732 = vunpack.c.l.b16 %v724
    %v733 = vunpack.c.l.b16 %v725
    %v734 = vunpack.c.l.b16 %v726
    %v735 = vpack.c.b16 %v732, %v731
    %v736 = vpack.c.b16 %v734, %v733
    %v740 = vsel %vm387, %v722, 0
    %742 = vmatprep.subr.bf16.mxu0 0
    %743 = vmatpush1.bf16.msra.mxu0 0
    %744 = vmatprep.subr.bf16.mxu0 0
    %745 = vmatpush1.bf16.msra.mxu0 0
    %746 = vmatprep.subr.bf16.mxu0 0
    %747 = vmatpush1.bf16.msra.mxu0 0
    %748 = vmatprep.subr.bf16.mxu0 0
    %749 = vmatpush1.bf16.msra.mxu0 0
    %750 = vmatprep.subr.bf16.mxu0 0
    %751 = vmatpush1.bf16.msra.mxu0 0
    %752 = vmatprep.subr.bf16.mxu0 0
    %753 = vmatpush1.bf16.msra.mxu0 0
    %754 = vmatprep.subr.bf16.mxu0 0
    %755 = vmatpush1.bf16.msra.mxu0 %v736
    %756 = vmatprep.subr.bf16.mxu0 0
    %757 = vmatpush1.bf16.msra.mxu0 %v735
    %758 = vmatprep.subr.bf16.mxu0 0
    %759 = vmatpush2.bf16.msra.mxu0 0
    %760 = vmatprep.subr.bf16.mxu0 0
    %761 = vmatpush2.bf16.msra.mxu0 0
    %762 = vmatprep.subr.bf16.mxu0 0
    %763 = vmatpush2.bf16.msra.mxu0 0
    %764 = vmatprep.subr.bf16.mxu0 0
    %765 = vmatpush2.bf16.msra.mxu0 0
    %766 = vmatprep.subr.bf16.mxu0 0
    %767 = vmatpush2.bf16.msra.mxu0 0
    %768 = vmatprep.subr.bf16.mxu0 0
    %769 = vmatpush2.bf16.msra.mxu0 0
    %770 = vmatprep.subr.bf16.mxu0 0
    %771 = vmatpush2.bf16.msra.mxu0 0
    %772 = vmatprep.subr.bf16.mxu0 0
    %773 = vmatpush2.bf16.msra.mxu0 0
    %774 = vmatprep.mubr.bf16.mxu0 0
    %775 = vmatmul.mubr.bf16.gmra.mxu0 %v740
    %v776 = vpop.f32.mrf.mxu0
    %v777 = vadd.f32 0.0, %v776
    %v778 = vpop.f32.mrf.mxu0
    %v779 = vpop.f32.mrf.mxu0
    %v780 = vpop.f32.mrf.mxu0
    %781 = vdwg.mxu0
    %v786 = vunpack.c.l.b16 %v551
    %v787 = vunpack.c.l.b16 %v552
    %v788 = vunpack.c.l.b16 %v553
    %v789 = vunpack.c.l.b16 %v554
    %v790 = vpack.c.b16 %v787, %v786
    %v791 = vpack.c.b16 %v789, %v788
    %v795 = vsel %vm387, %v550, 0
    %797 = vmatprep.subr.bf16.mxu0 0
    %798 = vmatpush1.bf16.msra.mxu0 0
    %799 = vmatprep.subr.bf16.mxu0 0
    %800 = vmatpush1.bf16.msra.mxu0 0
    %801 = vmatprep.subr.bf16.mxu0 0
    %802 = vmatpush1.bf16.msra.mxu0 0
    %803 = vmatprep.subr.bf16.mxu0 0
    %804 = vmatpush1.bf16.msra.mxu0 0
    %805 = vmatprep.subr.bf16.mxu0 0
    %806 = vmatpush1.bf16.msra.mxu0 0
    %807 = vmatprep.subr.bf16.mxu0 0
    %808 = vmatpush1.bf16.msra.mxu0 0
    %809 = vmatprep.subr.bf16.mxu0 0
    %810 = vmatpush1.bf16.msra.mxu0 %v791
    %811 = vmatprep.subr.bf16.mxu0 0
    %812 = vmatpush1.bf16.msra.mxu0 %v790
    %813 = vmatprep.subr.bf16.mxu0 0
    %814 = vmatpush2.bf16.msra.mxu0 0
    %815 = vmatprep.subr.bf16.mxu0 0
    %816 = vmatpush2.bf16.msra.mxu0 0
    %817 = vmatprep.subr.bf16.mxu0 0
    %818 = vmatpush2.bf16.msra.mxu0 0
    %819 = vmatprep.subr.bf16.mxu0 0
    %820 = vmatpush2.bf16.msra.mxu0 0
    %821 = vmatprep.subr.bf16.mxu0 0
    %822 = vmatpush2.bf16.msra.mxu0 0
    %823 = vmatprep.subr.bf16.mxu0 0
    %824 = vmatpush2.bf16.msra.mxu0 0
    %825 = vmatprep.subr.bf16.mxu0 0
    %826 = vmatpush2.bf16.msra.mxu0 0
    %827 = vmatprep.subr.bf16.mxu0 0
    %828 = vmatpush2.bf16.msra.mxu0 0
    %829 = vmatprep.mubr.bf16.mxu0 0
    %830 = vmatmul.mubr.bf16.gmra.mxu0 %v795
    %v831 = vpop.f32.mrf.mxu0
    %v832 = vadd.f32 %v777, %v831
    %v833 = vpop.f32.mrf.mxu0
    %v834 = vpop.f32.mrf.mxu0
    %v835 = vpop.f32.mrf.mxu0
    %836 = vdwg.mxu0
    %837 = vrot.lane.b32.xlu0 %v375, 64
    %v838 = vpop.permute.xlu0 %837
    %839 = vrot.lane.b32.xlu0 %v383, 64
    %v840 = vpop.permute.xlu0 %839
    %v841 = vsel %vm387, %v838, 0
    %v843 = vsel %vm387, %v840, 0
    %845 = vmatprep.subr.mxu0 0.0
    %846 = vmatpush1.xpose.msra.mxu0 0.0
    %847 = vmatprep.subr.mxu0 0.0
    %848 = vmatpush1.xpose.msra.mxu0 0.0
    %849 = vmatprep.subr.mxu0 0.0
    %850 = vmatpush1.xpose.msra.mxu0 0.0
    %851 = vmatprep.subr.mxu0 0.0
    %852 = vmatpush1.xpose.msra.mxu0 0.0
    %853 = vmatprep.subr.mxu0 0.0
    %854 = vmatpush1.xpose.msra.mxu0 0.0
    %855 = vmatprep.subr.mxu0 0.0
    %856 = vmatpush1.xpose.msra.mxu0 0.0
    %857 = vmatprep.subr.mxu0 0.0
    %858 = vmatpush1.xpose.msra.mxu0 0.0
    %859 = vmatprep.subr.mxu0 0.0
    %860 = vmatpush1.xpose.msra.mxu0 0.0
    %861 = vmatprep.subr.mxu0 0.0
    %862 = vmatpush1.xpose.msra.mxu0 0.0
    %863 = vmatprep.subr.mxu0 0.0
    %864 = vmatpush1.xpose.msra.mxu0 0.0
    %865 = vmatprep.subr.mxu0 0.0
    %866 = vmatpush1.xpose.msra.mxu0 0.0
    %867 = vmatprep.subr.mxu0 0.0
    %868 = vmatpush1.xpose.msra.mxu0 0.0
    %869 = vmatprep.subr.mxu0 0.0
    %870 = vmatpush1.xpose.msra.mxu0 0.0
    %871 = vmatprep.subr.mxu0 0.0
    %872 = vmatpush1.xpose.msra.mxu0 0.0
    %873 = vmatprep.subr.mxu0 0.0
    %874 = vmatpush1.xpose.msra.mxu0 0.0
    %875 = vmatprep.subr.mxu0 0.0
    %876 = vmatpush1.xpose.msra.mxu0 %v843
    %877 = vmatprep.subr.mxu0 0.0
    %878 = vmatpush2.xpose.msra.mxu0 0.0
    %879 = vmatprep.subr.mxu0 0.0
    %880 = vmatpush2.xpose.msra.mxu0 0.0
    %881 = vmatprep.subr.mxu0 0.0
    %882 = vmatpush2.xpose.msra.mxu0 0.0
    %883 = vmatprep.subr.mxu0 0.0
    %884 = vmatpush2.xpose.msra.mxu0 0.0
    %885 = vmatprep.subr.mxu0 0.0
    %886 = vmatpush2.xpose.msra.mxu0 0.0
    %887 = vmatprep.subr.mxu0 0.0
    %888 = vmatpush2.xpose.msra.mxu0 0.0
    %889 = vmatprep.subr.mxu0 0.0
    %890 = vmatpush2.xpose.msra.mxu0 0.0
    %891 = vmatprep.subr.mxu0 0.0
    %892 = vmatpush2.xpose.msra.mxu0 0.0
    %893 = vmatprep.subr.mxu0 0.0
    %894 = vmatpush2.xpose.msra.mxu0 0.0
    %895 = vmatprep.subr.mxu0 0.0
    %896 = vmatpush2.xpose.msra.mxu0 0.0
    %897 = vmatprep.subr.mxu0 0.0
    %898 = vmatpush2.xpose.msra.mxu0 0.0
    %899 = vmatprep.subr.mxu0 0.0
    %900 = vmatpush2.xpose.msra.mxu0 0.0
    %901 = vmatprep.subr.mxu0 0.0
    %902 = vmatpush2.xpose.msra.mxu0 0.0
    %903 = vmatprep.subr.mxu0 0.0
    %904 = vmatpush2.xpose.msra.mxu0 0.0
    %905 = vmatprep.subr.mxu0 0.0
    %906 = vmatpush2.xpose.msra.mxu0 0.0
    %907 = vmatprep.subr.mxu0 0.0
    %908 = vmatpush2.xpose.msra.mxu0 0.0
    %909 = vmatprep.mubr.f32.mxu0 0.0
    %910 = vmatmul.mubr.f32.gmra.mxu0 %v841
    %v911 = vpop.f32.mrf.mxu0
    %v912 = vadd.f32 0.0, %v911
    %v913 = vpop.f32.mrf.mxu0
    %914 = vdwg.mxu0
    %v915 = vsel %vm386, %v912, -1e+30
    %v916 = vsel %vm465, %v915, -inf
    %917 = vmax.xlane.f32.xlu0 %v916
    %v918 = vpop.xlane.xlu0 %917
    %v919 = vsub.f32 %v915, %v918
    %v920 = vmul.f32 %v919, 1.442695
    %v921 = vpow.pop %v920
    %v922 = vsel %vm465, %v921, 0.0
    %923 = vadd.xlane.f32.xlu0 %v922
    %v924 = vpop.xlane.xlu0 %923
    %925 = vrot.lane.b32.xlu0 %v345, 64
    %v926 = vpop.permute.xlu0 %925
    %v929 = vsel %vm465, %v921, 0
    %931 = vmatprep.subr.mxu0 0.0
    %932 = vmatpush1.msra.mxu0 0.0
    %933 = vmatprep.subr.mxu0 0.0
    %934 = vmatpush1.msra.mxu0 0.0
    %935 = vmatprep.subr.mxu0 0.0
    %936 = vmatpush1.msra.mxu0 0.0
    %937 = vmatprep.subr.mxu0 0.0
    %938 = vmatpush1.msra.mxu0 0.0
    %939 = vmatprep.subr.mxu0 0.0
    %940 = vmatpush1.msra.mxu0 0.0
    %941 = vmatprep.subr.mxu0 0.0
    %942 = vmatpush1.msra.mxu0 0.0
    %943 = vmatprep.subr.mxu0 0.0
    %944 = vmatpush1.msra.mxu0 0.0
    %945 = vmatprep.subr.mxu0 0.0
    %946 = vmatpush1.msra.mxu0 0.0
    %947 = vmatprep.subr.mxu0 0.0
    %948 = vmatpush1.msra.mxu0 0.0
    %949 = vmatprep.subr.mxu0 0.0
    %950 = vmatpush1.msra.mxu0 0.0
    %951 = vmatprep.subr.mxu0 0.0
    %952 = vmatpush1.msra.mxu0 0.0
    %953 = vmatprep.subr.mxu0 0.0
    %954 = vmatpush1.msra.mxu0 0.0
    %955 = vmatprep.subr.mxu0 0.0
    %956 = vmatpush1.msra.mxu0 0.0
    %957 = vmatprep.subr.mxu0 0.0
    %958 = vmatpush1.msra.mxu0 0.0
    %959 = vmatprep.subr.mxu0 0.0
    %960 = vmatpush1.msra.mxu0 0.0
    %961 = vmatprep.subr.mxu0 0.0
    %962 = vmatpush1.msra.mxu0 %v926
    %963 = vmatprep.subr.mxu0 0.0
    %964 = vmatpush2.msra.mxu0 0.0
    %965 = vmatprep.subr.mxu0 0.0
    %966 = vmatpush2.msra.mxu0 0.0
    %967 = vmatprep.subr.mxu0 0.0
    %968 = vmatpush2.msra.mxu0 0.0
    %969 = vmatprep.subr.mxu0 0.0
    %970 = vmatpush2.msra.mxu0 0.0
    %971 = vmatprep.subr.mxu0 0.0
    %972 = vmatpush2.msra.mxu0 0.0
    %973 = vmatprep.subr.mxu0 0.0
    %974 = vmatpush2.msra.mxu0 0.0
    %975 = vmatprep.subr.mxu0 0.0
    %976 = vmatpush2.msra.mxu0 0.0
    %977 = vmatprep.subr.mxu0 0.0
    %978 = vmatpush2.msra.mxu0 0.0
    %979 = vmatprep.subr.mxu0 0.0
    %980 = vmatpush2.msra.mxu0 0.0
    %981 = vmatprep.subr.mxu0 0.0
    %982 = vmatpush2.msra.mxu0 0.0
    %983 = vmatprep.subr.mxu0 0.0
    %984 = vmatpush2.msra.mxu0 0.0
    %985 = vmatprep.subr.mxu0 0.0
    %986 = vmatpush2.msra.mxu0 0.0
    %987 = vmatprep.subr.mxu0 0.0
    %988 = vmatpush2.msra.mxu0 0.0
    %989 = vmatprep.subr.mxu0 0.0
    %990 = vmatpush2.msra.mxu0 0.0
    %991 = vmatprep.subr.mxu0 0.0
    %992 = vmatpush2.msra.mxu0 0.0
    %993 = vmatprep.subr.mxu0 0.0
    %994 = vmatpush2.msra.mxu0 0.0
    %995 = vmatprep.mubr.f32.mxu0 0.0
    %996 = vmatmul.mubr.f32.gmra.mxu0 %v929
    %v997 = vpop.f32.mrf.mxu0
    %v998 = vadd.f32 0.0, %v997
    %v999 = vpop.f32.mrf.mxu0
    %1000 = vdwg.mxu0
    %v1001 = vrcp.pop %v924
    %v1002 = vmul.f32 %v998, %v1001
    %v1003 = vpack.c.bf16 %v1002, %v1002
    %v1004 = vld [vmem:[#allocation8 + $0x20] sm:$0xf]
    %v1005 = vld [vmem:[#allocation8 + $0x24] sm:$0xf]
    %v1006 = vld [vmem:[#allocation8 + $0x28] sm:$0xf]
    %v1007 = vld [vmem:[#allocation8 + $0x2c] sm:$0xf]
    %v1012 = vunpack.c.l.b16 %v1004
    %v1013 = vunpack.c.l.b16 %v1005
    %v1014 = vunpack.c.l.b16 %v1006
    %v1015 = vunpack.c.l.b16 %v1007
    %v1016 = vpack.c.b16 %v1013, %v1012
    %v1017 = vpack.c.b16 %v1015, %v1014
    %v1021 = vsel %vm387, %v1003, 0
    %1023 = vmatprep.subr.bf16.mxu0 0
    %1024 = vmatpush1.bf16.msra.mxu0 0
    %1025 = vmatprep.subr.bf16.mxu0 0
    %1026 = vmatpush1.bf16.msra.mxu0 0
    %1027 = vmatprep.subr.bf16.mxu0 0
    %1028 = vmatpush1.bf16.msra.mxu0 0
    %1029 = vmatprep.subr.bf16.mxu0 0
    %1030 = vmatpush1.bf16.msra.mxu0 0
    %1031 = vmatprep.subr.bf16.mxu0 0
    %1032 = vmatpush1.bf16.msra.mxu0 0
    %1033 = vmatprep.subr.bf16.mxu0 0
    %1034 = vmatpush1.bf16.msra.mxu0 0
    %1035 = vmatprep.subr.bf16.mxu0 0
    %1036 = vmatpush1.bf16.msra.mxu0 %v1017
    %1037 = vmatprep.subr.bf16.mxu0 0
    %1038 = vmatpush1.bf16.msra.mxu0 %v1016
    %1039 = vmatprep.subr.bf16.mxu0 0
    %1040 = vmatpush2.bf16.msra.mxu0 0
    %1041 = vmatprep.subr.bf16.mxu0 0
    %1042 = vmatpush2.bf16.msra.mxu0 0
    %1043 = vmatprep.subr.bf16.mxu0 0
    %1044 = vmatpush2.bf16.msra.mxu0 0
    %1045 = vmatprep.subr.bf16.mxu0 0
    %1046 = vmatpush2.bf16.msra.mxu0 0
    %1047 = vmatprep.subr.bf16.mxu0 0
    %1048 = vmatpush2.bf16.msra.mxu0 0
    %1049 = vmatprep.subr.bf16.mxu0 0
    %1050 = vmatpush2.bf16.msra.mxu0 0
    %1051 = vmatprep.subr.bf16.mxu0 0
    %1052 = vmatpush2.bf16.msra.mxu0 0
    %1053 = vmatprep.subr.bf16.mxu0 0
    %1054 = vmatpush2.bf16.msra.mxu0 0
    %1055 = vmatprep.mubr.bf16.mxu0 0
    %1056 = vmatmul.mubr.bf16.gmra.mxu0 %v1021
    %v1057 = vpop.f32.mrf.mxu0
    %v1058 = vadd.f32 0.0, %v1057
    %v1059 = vpop.f32.mrf.mxu0
    %v1060 = vpop.f32.mrf.mxu0
    %v1061 = vpop.f32.mrf.mxu0
    %1062 = vdwg.mxu0
    %v1063 = vadd.f32 %v832, %v1058
    %1064 = vrot.lane.b32.xlu0 %v375, 32
    %v1065 = vpop.permute.xlu0 %1064
    %1066 = vrot.lane.b32.xlu0 %v383, 32
    %v1067 = vpop.permute.xlu0 %1066
    %v1068 = vsel %vm387, %v1065, 0
    %v1070 = vsel %vm387, %v1067, 0
    %1072 = vmatprep.subr.mxu0 0.0
    %1073 = vmatpush1.xpose.msra.mxu0 0.0
    %1074 = vmatprep.subr.mxu0 0.0
    %1075 = vmatpush1.xpose.msra.mxu0 0.0
    %1076 = vmatprep.subr.mxu0 0.0
    %1077 = vmatpush1.xpose.msra.mxu0 0.0
    %1078 = vmatprep.subr.mxu0 0.0
    %1079 = vmatpush1.xpose.msra.mxu0 0.0
    %1080 = vmatprep.subr.mxu0 0.0
    %1081 = vmatpush1.xpose.msra.mxu0 0.0
    %1082 = vmatprep.subr.mxu0 0.0
    %1083 = vmatpush1.xpose.msra.mxu0 0.0
    %1084 = vmatprep.subr.mxu0 0.0
    %1085 = vmatpush1.xpose.msra.mxu0 0.0
    %1086 = vmatprep.subr.mxu0 0.0
    %1087 = vmatpush1.xpose.msra.mxu0 0.0
    %1088 = vmatprep.subr.mxu0 0.0
    %1089 = vmatpush1.xpose.msra.mxu0 0.0
    %1090 = vmatprep.subr.mxu0 0.0
    %1091 = vmatpush1.xpose.msra.mxu0 0.0
    %1092 = vmatprep.subr.mxu0 0.0
    %1093 = vmatpush1.xpose.msra.mxu0 0.0
    %1094 = vmatprep.subr.mxu0 0.0
    %1095 = vmatpush1.xpose.msra.mxu0 0.0
    %1096 = vmatprep.subr.mxu0 0.0
    %1097 = vmatpush1.xpose.msra.mxu0 0.0
    %1098 = vmatprep.subr.mxu0 0.0
    %1099 = vmatpush1.xpose.msra.mxu0 0.0
    %1100 = vmatprep.subr.mxu0 0.0
    %1101 = vmatpush1.xpose.msra.mxu0 0.0
    %1102 = vmatprep.subr.mxu0 0.0
    %1103 = vmatpush1.xpose.msra.mxu0 %v1070
    %1104 = vmatprep.subr.mxu0 0.0
    %1105 = vmatpush2.xpose.msra.mxu0 0.0
    %1106 = vmatprep.subr.mxu0 0.0
    %1107 = vmatpush2.xpose.msra.mxu0 0.0
    %1108 = vmatprep.subr.mxu0 0.0
    %1109 = vmatpush2.xpose.msra.mxu0 0.0
    %1110 = vmatprep.subr.mxu0 0.0
    %1111 = vmatpush2.xpose.msra.mxu0 0.0
    %1112 = vmatprep.subr.mxu0 0.0
    %1113 = vmatpush2.xpose.msra.mxu0 0.0
    %1114 = vmatprep.subr.mxu0 0.0
    %1115 = vmatpush2.xpose.msra.mxu0 0.0
    %1116 = vmatprep.subr.mxu0 0.0
    %1117 = vmatpush2.xpose.msra.mxu0 0.0
    %1118 = vmatprep.subr.mxu0 0.0
    %1119 = vmatpush2.xpose.msra.mxu0 0.0
    %1120 = vmatprep.subr.mxu0 0.0
    %1121 = vmatpush2.xpose.msra.mxu0 0.0
    %1122 = vmatprep.subr.mxu0 0.0
    %1123 = vmatpush2.xpose.msra.mxu0 0.0
    %1124 = vmatprep.subr.mxu0 0.0
    %1125 = vmatpush2.xpose.msra.mxu0 0.0
    %1126 = vmatprep.subr.mxu0 0.0
    %1127 = vmatpush2.xpose.msra.mxu0 0.0
    %1128 = vmatprep.subr.mxu0 0.0
    %1129 = vmatpush2.xpose.msra.mxu0 0.0
    %1130 = vmatprep.subr.mxu0 0.0
    %1131 = vmatpush2.xpose.msra.mxu0 0.0
    %1132 = vmatprep.subr.mxu0 0.0
    %1133 = vmatpush2.xpose.msra.mxu0 0.0
    %1134 = vmatprep.subr.mxu0 0.0
    %1135 = vmatpush2.xpose.msra.mxu0 0.0
    %1136 = vmatprep.mubr.f32.mxu0 0.0
    %1137 = vmatmul.mubr.f32.gmra.mxu0 %v1068
    %v1138 = vpop.f32.mrf.mxu0
    %v1139 = vadd.f32 0.0, %v1138
    %v1140 = vpop.f32.mrf.mxu0
    %1141 = vdwg.mxu0
    %v1142 = vsel %vm386, %v1139, -1e+30
    %v1143 = vsel %vm465, %v1142, -inf
    %1144 = vmax.xlane.f32.xlu0 %v1143
    %v1145 = vpop.xlane.xlu0 %1144
    %v1146 = vsub.f32 %v1142, %v1145
    %v1147 = vmul.f32 %v1146, 1.442695
    %v1148 = vpow.pop %v1147
    %v1149 = vsel %vm465, %v1148, 0.0
    %1150 = vadd.xlane.f32.xlu0 %v1149
    %v1151 = vpop.xlane.xlu0 %1150
    %1152 = vrot.lane.b32.xlu0 %v345, 32
    %v1153 = vpop.permute.xlu0 %1152
    %v1156 = vsel %vm465, %v1148, 0
    %1158 = vmatprep.subr.mxu0 0.0
    %1159 = vmatpush1.msra.mxu0 0.0
    %1160 = vmatprep.subr.mxu0 0.0
    %1161 = vmatpush1.msra.mxu0 0.0
    %1162 = vmatprep.subr.mxu0 0.0
    %1163 = vmatpush1.msra.mxu0 0.0
    %1164 = vmatprep.subr.mxu0 0.0
    %1165 = vmatpush1.msra.mxu0 0.0
    %1166 = vmatprep.subr.mxu0 0.0
    %1167 = vmatpush1.msra.mxu0 0.0
    %1168 = vmatprep.subr.mxu0 0.0
    %1169 = vmatpush1.msra.mxu0 0.0
    %1170 = vmatprep.subr.mxu0 0.0
    %1171 = vmatpush1.msra.mxu0 0.0
    %1172 = vmatprep.subr.mxu0 0.0
    %1173 = vmatpush1.msra.mxu0 0.0
    %1174 = vmatprep.subr.mxu0 0.0
    %1175 = vmatpush1.msra.mxu0 0.0
    %1176 = vmatprep.subr.mxu0 0.0
    %1177 = vmatpush1.msra.mxu0 0.0
    %1178 = vmatprep.subr.mxu0 0.0
    %1179 = vmatpush1.msra.mxu0 0.0
    %1180 = vmatprep.subr.mxu0 0.0
    %1181 = vmatpush1.msra.mxu0 0.0
    %1182 = vmatprep.subr.mxu0 0.0
    %1183 = vmatpush1.msra.mxu0 0.0
    %1184 = vmatprep.subr.mxu0 0.0
    %1185 = vmatpush1.msra.mxu0 0.0
    %1186 = vmatprep.subr.mxu0 0.0
    %1187 = vmatpush1.msra.mxu0 0.0
    %1188 = vmatprep.subr.mxu0 0.0
    %1189 = vmatpush1.msra.mxu0 %v1153
    %1190 = vmatprep.subr.mxu0 0.0
    %1191 = vmatpush2.msra.mxu0 0.0
    %1192 = vmatprep.subr.mxu0 0.0
    %1193 = vmatpush2.msra.mxu0 0.0
    %1194 = vmatprep.subr.mxu0 0.0
    %1195 = vmatpush2.msra.mxu0 0.0
    %1196 = vmatprep.subr.mxu0 0.0
    %1197 = vmatpush2.msra.mxu0 0.0
    %1198 = vmatprep.subr.mxu0 0.0
    %1199 = vmatpush2.msra.mxu0 0.0
    %1200 = vmatprep.subr.mxu0 0.0
    %1201 = vmatpush2.msra.mxu0 0.0
    %1202 = vmatprep.subr.mxu0 0.0
    %1203 = vmatpush2.msra.mxu0 0.0
    %1204 = vmatprep.subr.mxu0 0.0
    %1205 = vmatpush2.msra.mxu0 0.0
    %1206 = vmatprep.subr.mxu0 0.0
    %1207 = vmatpush2.msra.mxu0 0.0
    %1208 = vmatprep.subr.mxu0 0.0
    %1209 = vmatpush2.msra.mxu0 0.0
    %1210 = vmatprep.subr.mxu0 0.0
    %1211 = vmatpush2.msra.mxu0 0.0
    %1212 = vmatprep.subr.mxu0 0.0
    %1213 = vmatpush2.msra.mxu0 0.0
    %1214 = vmatprep.subr.mxu0 0.0
    %1215 = vmatpush2.msra.mxu0 0.0
    %1216 = vmatprep.subr.mxu0 0.0
    %1217 = vmatpush2.msra.mxu0 0.0
    %1218 = vmatprep.subr.mxu0 0.0
    %1219 = vmatpush2.msra.mxu0 0.0
    %1220 = vmatprep.subr.mxu0 0.0
    %1221 = vmatpush2.msra.mxu0 0.0
    %1222 = vmatprep.mubr.f32.mxu0 0.0
    %1223 = vmatmul.mubr.f32.gmra.mxu0 %v1156
    %v1224 = vpop.f32.mrf.mxu0
    %v1225 = vadd.f32 0.0, %v1224
    %v1226 = vpop.f32.mrf.mxu0
    %1227 = vdwg.mxu0
    %v1228 = vrcp.pop %v1151
    %v1229 = vmul.f32 %v1225, %v1228
    %v1230 = vpack.c.bf16 %v1229, %v1229
    %v1231 = vld [vmem:[#allocation8 + $0x30] sm:$0xf]
    %v1232 = vld [vmem:[#allocation8 + $0x34] sm:$0xf]
    %v1233 = vld [vmem:[#allocation8 + $0x38] sm:$0xf]
    %v1234 = vld [vmem:[#allocation8 + $0x3c] sm:$0xf]
    %v1239 = vunpack.c.l.b16 %v1231
    %v1240 = vunpack.c.l.b16 %v1232
    %v1241 = vunpack.c.l.b16 %v1233
    %v1242 = vunpack.c.l.b16 %v1234
    %v1243 = vpack.c.b16 %v1240, %v1239
    %v1244 = vpack.c.b16 %v1242, %v1241
    %v1248 = vsel %vm387, %v1230, 0
    %1250 = vmatprep.subr.bf16.mxu0 0
    %1251 = vmatpush1.bf16.msra.mxu0 0
    %1252 = vmatprep.subr.bf16.mxu0 0
    %1253 = vmatpush1.bf16.msra.mxu0 0
    %1254 = vmatprep.subr.bf16.mxu0 0
    %1255 = vmatpush1.bf16.msra.mxu0 0
    %1256 = vmatprep.subr.bf16.mxu0 0
    %1257 = vmatpush1.bf16.msra.mxu0 0
    %1258 = vmatprep.subr.bf16.mxu0 0
    %1259 = vmatpush1.bf16.msra.mxu0 0
    %1260 = vmatprep.subr.bf16.mxu0 0
    %1261 = vmatpush1.bf16.msra.mxu0 0
    %1262 = vmatprep.subr.bf16.mxu0 0
    %1263 = vmatpush1.bf16.msra.mxu0 %v1244
    %1264 = vmatprep.subr.bf16.mxu0 0
    %1265 = vmatpush1.bf16.msra.mxu0 %v1243
    %1266 = vmatprep.subr.bf16.mxu0 0
    %1267 = vmatpush2.bf16.msra.mxu0 0
    %1268 = vmatprep.subr.bf16.mxu0 0
    %1269 = vmatpush2.bf16.msra.mxu0 0
    %1270 = vmatprep.subr.bf16.mxu0 0
    %1271 = vmatpush2.bf16.msra.mxu0 0
    %1272 = vmatprep.subr.bf16.mxu0 0
    %1273 = vmatpush2.bf16.msra.mxu0 0
    %1274 = vmatprep.subr.bf16.mxu0 0
    %1275 = vmatpush2.bf16.msra.mxu0 0
    %1276 = vmatprep.subr.bf16.mxu0 0
    %1277 = vmatpush2.bf16.msra.mxu0 0
    %1278 = vmatprep.subr.bf16.mxu0 0
    %1279 = vmatpush2.bf16.msra.mxu0 0
    %1280 = vmatprep.subr.bf16.mxu0 0
    %1281 = vmatpush2.bf16.msra.mxu0 0
    %1282 = vmatprep.mubr.bf16.mxu0 0
    %1283 = vmatmul.mubr.bf16.gmra.mxu0 %v1248
    %v1284 = vpop.f32.mrf.mxu0
    %v1285 = vadd.f32 0.0, %v1284
    %v1286 = vpop.f32.mrf.mxu0
    %v1287 = vpop.f32.mrf.mxu0
    %v1288 = vpop.f32.mrf.mxu0
    %1289 = vdwg.mxu0
    %v1290 = vadd.f32 %v1063, %v1285
    %v1291 = vld [vmem:[%s4] sm:$0x1]
    %v1293 = vlaneseq
    %v1294 = vshrl.u32 %v1293, 7
    %v1295 = vsub.s32 0, %v1294
    %v1296 = vrot.slane %v1291, %v1295
    %v1298 = vadd.f32 %v1290, %v1296
    %1299 = vst [vmem:[#allocation11] sm:$0xff] %v1298
    // Predicated region
    $region50: #{tpu_custom_call.1} parent=1 // pred_check
      _
    $region51: #{tpu_custom_call.1} parent=1 // pred_check_branch
      %1301 = sbr.rel (0) target = $region53
    $region52: #{tpu_custom_call.1} parent=1 // pred_region
      %s1303 = ssub.s32 128, 128
      %1304 = vsyncadd [#allocation4], %s1303
      %s1306 = sshll.u32 [#allocation11], 4
      %s1307 = int_to_ptr.vmem [resolvable:$true] %s1306
      %1309 = dma.vmem_to_hbm [thread:$0]  %s1307, 128, %s7, [#allocation4]
    $region53: #{tpu_custom_call.1} parent=1 // pred_fallthru
      _
    // Predicated region
    $region54: #{tpu_custom_call.1} parent=1 // pred_check
      _
    $region55: #{tpu_custom_call.1} parent=1 // pred_check_branch
      %1311 = sbr.rel (0) target = $region57
    $region56: #{tpu_custom_call.1} parent=1 // pred_region
      %1312 = dma.done [#allocation4], 128
    $region57: #{tpu_custom_call.1} parent=1 // pred_fallthru
      _
    %1313 = vsyncpa [#allocation3], 1
    %1314 = vsyncpa [#allocation6], 1
    %1315 = vsyncpa [#allocation9], 1
    %1316 = vsyncpa [#allocation4], 1

</llo_original>
